<compile_context>
chip_gen: v7x
topology: tpu7x:2x2x1
jax: 0.10.0
libtpu: 0.0.40
codegen_flags: <defaults>
</compile_context>

<pallas_src>
import functools

import jax
import jax.numpy as jnp
from jax import lax
from jax.experimental import pallas as pl
from jax.experimental.pallas import tpu as pltpu

EPS = 1e-5


# --------------------------------- kernel -----------------------------------

def _conv_bn_relu(pad_ref, w_ref, sh_ref, D, H, W, Cin):
    """relu(conv3x3x3(x) + shift) as ONE MXU matmul.

    pad_ref : (D+2, H+2, W*Cin) compute-dtype VMEM scratch; D/H halo is zero,
              interior holds the activation.  W padding is NOT materialized -
              it is folded into the banded weight matrix.
    w_ref   : (9*W*Cin, W*Cout) banded weights, rows ordered (kd, kh, q, ci),
              columns ordered (w, co); BN scale folded along co.
    sh_ref  : (1, W*Cout) f32 shift (conv bias + BN), tiled along w.
    """
    slabs = [pad_ref[kd:kd + D, kh:kh + H, :]            # 9 x (D, H, W*Cin)
             for kd in range(3) for kh in range(3)]
    xcols = jnp.concatenate(slabs, axis=-1)              # (D, H, 9*W*Cin)
    xcols = xcols.reshape(D * H, 9 * W * Cin)            # leading collapse: free
    # NOTE: default MXU precision; pass precision=HIGHEST for a bit-tight f32
    # reference path (default passes the 2e-3 check in __main__).
    acc = jnp.dot(xcols, w_ref[...],
                  preferred_element_type=jnp.float32)    # (D*H, W*Cout) f32
    return jnp.maximum(acc + sh_ref[...], 0.0)           # shift + ReLU epilogue


def layer_kernel(x_ref, w1_ref, sh1_ref, w2_ref, sh2_ref, o_ref,
                 xpad_ref, ypad_ref, *, D, H, W, Cin, Cout):
    """out = x + relu(bn2(conv2(relu(bn1(conv1(x))))))   (identity skip)."""
    cdt = w1_ref.dtype                                   # MXU compute dtype

    # Re-zero the halo scratches every step (cheap) so correctness does not
    # depend on grid-step ordering: with dimension_semantics=("parallel",)
    # the v7x megacore split means not every core executes program_id(0)==0.
    xpad_ref[...] = jnp.zeros(xpad_ref.shape, xpad_ref.dtype)
    ypad_ref[...] = jnp.zeros(ypad_ref.shape, ypad_ref.dtype)

    x = x_ref[0]                                         # (D*H, W*Cin) f32, lane-dense load
    # Cast to the compute dtype BEFORE any copy; f32 x stays live for the skip.
    xpad_ref[1:D + 1, 1:H + 1, :] = x.reshape(D, H, W * Cin).astype(cdt)

    y1 = _conv_bn_relu(xpad_ref, w1_ref, sh1_ref, D, H, W, Cin)
    ypad_ref[1:D + 1, 1:H + 1, :] = y1.reshape(D, H, W * Cout).astype(cdt)

    y2 = _conv_bn_relu(ypad_ref, w2_ref, sh2_ref, D, H, W, Cout)

    out = x + y2                                         # stride=1 -> Cin == Cout
    o_ref[...] = out.reshape(1, D * H, W * Cout).astype(o_ref.dtype)


# ------------------------------- host packing --------------------------------

def _fold_bn(conv_bias, gamma, beta, mean, var):
    scale = gamma / jnp.sqrt(var + EPS)
    shift = (conv_bias - mean) * scale + beta
    return scale.astype(jnp.float32), shift.astype(jnp.float32)


def _pack_banded(w_pt, scale, W, compute_dtype):
    """PyTorch [Cout, Cin, 3, 3, 3] -> banded (9*W*Cin, W*Cout) matmul weights.

    The kw taps and the W zero-padding are folded into a block-banded matrix:
      band[(kd, kh, q, ci), (w, co)] = w[kd, kh, q - w + 1, ci, co]  if |q-w|<=1
    so the conv over W becomes part of the MXU contraction.  BN scale is folded
    along Cout.  (Small-C/W specialization; see TODO for production widths.)
    """
    cout, cin = w_pt.shape[0], w_pt.shape[1]
    w = jnp.transpose(w_pt, (2, 3, 4, 1, 0)) * scale          # (kd,kh,kw,ci,co)
    # Sw[kw, q, w] = 1 iff q == w + kw - 1 (out-of-range rows dropped == zero pad)
    sw = jnp.stack([jnp.eye(W, W, k=1 - kw, dtype=w.dtype) for kw in range(3)])
    band = jnp.einsum("bqw,dhbic->dhqiwc", sw, w)             # (3,3,W,Cin,W,Cout)
    return band.reshape(9 * W * cin, W * cout).astype(compute_dtype)


def prepare_layer_params(p, W, compute_dtype=jnp.bfloat16):
    """Fold BN (inference) + conv bias and pack banded weights.

    Done ONCE at parameter-load time (hoisted out of the per-call jit).  bf16
    MXU inputs are the default on all generations (v5e/v6e/v7x); accumulation
    and epilogue stay f32.
    """
    cout, cin = p["w1"].shape[0], p["w1"].shape[1]
    assert cin == cout, (
        "stride=1 Layer has an identity skip -> in_channels must equal out_channels")
    sc1, sh1 = _fold_bn(p["b1"], p["g1"], p["be1"], p["m1"], p["v1"])
    sc2, sh2 = _fold_bn(p["b2"], p["g2"], p["be2"], p["m2"], p["v2"])
    return dict(
        w1=_pack_banded(p["w1"], sc1, W, compute_dtype),
        w2=_pack_banded(p["w2"], sc2, W, compute_dtype),
        sh1=jnp.tile(sh1, W).reshape(1, W * cout).astype(jnp.float32),
        sh2=jnp.tile(sh2, W).reshape(1, W * cout).astype(jnp.float32),
    )


def _vmem_limit_bytes():
    # Derive the scoped-VMEM budget from the chip (v7x: 64 MiB physical vs
    # 128 MiB on v5e/v6e) instead of hard-coding; this kernel needs < 2 MiB.
    try:
        cap = pltpu.get_tpu_info().vmem_capacity_bytes
    except Exception:
        cap = 64 * 1024 * 1024
    return min(cap // 2, 64 * 1024 * 1024)


# ------------------------------- forward pass ---------------------------------

@jax.jit
def layer_forward(x, packed):
    """Fused Pallas implementation of Layer.forward (stride=1, identity skip)."""
    N, D, H, W, Cin = x.shape
    Cout = packed["sh1"].shape[-1] // W
    cdt = packed["w1"].dtype

    # Lane-dense presentation of the activations: (N, D*H, W*C).  This reshape
    # is contiguity-preserving (free) outside the kernel.
    x2 = x.reshape(N, D * H, W * Cin)

    kernel = functools.partial(layer_kernel, D=D, H=H, W=W, Cin=Cin, Cout=Cout)
    out = pl.pallas_call(
        kernel,
        out_shape=jax.ShapeDtypeStruct((N, D * H, W * Cout), x.dtype),
        grid_spec=pltpu.PrefetchScalarGridSpec(
            num_scalar_prefetch=0,
            grid=(N,),                                    # N=2 -> both v7x TCs busy
            in_specs=[
                pl.BlockSpec((1, D * H, W * Cin), lambda n: (n, 0, 0)),
                pl.BlockSpec(packed["w1"].shape, lambda n: (0, 0)),
                pl.BlockSpec((1, W * Cout), lambda n: (0, 0)),
                pl.BlockSpec(packed["w2"].shape, lambda n: (0, 0)),
                pl.BlockSpec((1, W * Cout), lambda n: (0, 0)),
            ],
            out_specs=pl.BlockSpec((1, D * H, W * Cout), lambda n: (n, 0, 0)),
            scratch_shapes=[
                pltpu.VMEM((D + 2, H + 2, W * Cin), cdt),   # D/H-halo-padded x
                pltpu.VMEM((D + 2, H + 2, W * Cout), cdt),  # D/H-halo-padded y1
            ],
        ),
        compiler_params=pltpu.CompilerParams(
            dimension_semantics=("parallel",),            # megacore on v7x
            vmem_limit_bytes=_vmem_limit_bytes(),
        ),
    )(x2, packed["w1"], packed["sh1"], packed["w2"], packed["sh2"])
    return out.reshape(N, D, H, W, Cout)


# ----------------------------- parameter setup -------------------------------

def make_params(key, in_ch, out_ch):
    ks = jax.random.split(key, 10)

    def norm(k, shape, s=0.1):
        return (s * jax.random.normal(k, shape)).astype(jnp.float32)

    # PyTorch-layout conv weights [Cout, Cin, kd, kh, kw]
    w1 = norm(ks[0], (out_ch, in_ch, 3, 3, 3))
    b1 = norm(ks[1], (out_ch,))
    w2 = norm(ks[2], (out_ch, out_ch, 3, 3, 3))
    b2 = norm(ks[3], (out_ch,))

    # BatchNorm3d parameters / running stats (inference mode)
    g1 = 1.0 + norm(ks[4], (out_ch,))
    be1 = norm(ks[5], (out_ch,))
    m1 = norm(ks[6], (out_ch,))
    v1 = 1.0 + 0.5 * jax.random.uniform(ks[7], (out_ch,), dtype=jnp.float32)
    g2 = 1.0 + norm(ks[8], (out_ch,))
    be2 = norm(ks[9], (out_ch,))
    m2 = jnp.zeros((out_ch,), jnp.float32)
    v2 = jnp.ones((out_ch,), jnp.float32)

    return dict(w1=w1, b1=b1, g1=g1, be1=be1, m1=m1, v1=v1,
                w2=w2, b2=b2, g2=g2, be2=be2, m2=m2, v2=v2)


# ------------------------------ pure-JAX reference ---------------------------

def layer_reference(x, p):
    def conv(xx, w_pt, b):
        w = jnp.transpose(w_pt, (2, 3, 4, 1, 0))  # DHWIO
        y = lax.conv_general_dilated(
            xx, w, window_strides=(1, 1, 1), padding="SAME",
            dimension_numbers=("NDHWC", "DHWIO", "NDHWC"))
        return y + b

    def bn(y, g, b, m, v):
        return (y - m) / jnp.sqrt(v + EPS) * g + b

    y = jnp.maximum(bn(conv(x, p["w1"], p["b1"]),
                       p["g1"], p["be1"], p["m1"], p["v1"]), 0.0)
    y = jnp.maximum(bn(conv(y, p["w2"], p["b2"]),
                       p["g2"], p["be2"], p["m2"], p["v2"]), 0.0)
    return x + y   # identity skip (stride=1 requires in_ch == out_ch)


# ------------------------------------ main ------------------------------------

if __name__ == "__main__":
    key = jax.random.PRNGKey(0)
    k_x, k_p = jax.random.split(key)

    # stride=1 (module default) -> skip is Identity, so in_ch must equal out_ch.
    N, C, D, H, W = 2, 8, 8, 8, 8
    x = jax.random.normal(k_x, (N, D, H, W, C), dtype=jnp.float32)   # NDHWC
    params = make_params(k_p, C, C)

    ref = jax.block_until_ready(layer_reference(x, params))

    # f32 MXU-input path: tight check of the fused-kernel semantics.
    packed_f32 = prepare_layer_params(params, W, compute_dtype=jnp.float32)
    out_f32 = jax.block_until_ready(layer_forward(x, packed_f32))
    assert out_f32.shape == (N, D, H, W, C)
    assert jnp.allclose(out_f32, ref, atol=2e-3, rtol=2e-3), (
        float(jnp.max(jnp.abs(out_f32 - ref))))

    # bf16 MXU-input fast path (all generations; f32 accumulation / epilogue).
    packed_bf16 = prepare_layer_params(params, W, compute_dtype=jnp.bfloat16)
    out_bf16 = jax.block_until_ready(layer_forward(x, packed_bf16))
    err = float(jnp.max(jnp.abs(out_bf16 - ref)))
    scale = float(jnp.max(jnp.abs(ref))) + 1e-6
    assert err / scale < 0.05, (err, scale)

    print("KERNEL_OK")
</pallas_src>

<mosaic_0001>
module attributes {stable_mosaic.version = 11 : i64} {
  func.func @layer_kernel(%arg0: i32, %arg1: memref<1x64x64xf32, #tpu.memory_space<vmem>>, %arg2: memref<576x64xf32, #tpu.memory_space<vmem>>, %arg3: memref<1x64xf32, #tpu.memory_space<vmem>>, %arg4: memref<576x64xf32, #tpu.memory_space<vmem>>, %arg5: memref<1x64xf32, #tpu.memory_space<vmem>>, %arg6: memref<1x64x64xf32, #tpu.memory_space<vmem>>, %arg7: memref<10x10x64xf32, #tpu.memory_space<vmem>>, %arg8: memref<10x10x64xf32, #tpu.memory_space<vmem>>) attributes {dimension_semantics = [#tpu.dimension_semantics<parallel>], iteration_bounds = array<i64: 2>, scalar_prefetch = 0 : i64, scratch_operands = 2 : i64, tpu.core_type = #tpu.core_type<tc>, window_params = [{transform_indices = @transform_0, window_bounds = array<i64: 1, 64, 64>}, {pipeline_mode = #tpu.pipeline_mode<synchronous>, transform_indices = @transform_1, window_bounds = array<i64: 576, 64>}, {pipeline_mode = #tpu.pipeline_mode<synchronous>, transform_indices = @transform_2, window_bounds = array<i64: 1, 64>}, {pipeline_mode = #tpu.pipeline_mode<synchronous>, transform_indices = @transform_3, window_bounds = array<i64: 576, 64>}, {pipeline_mode = #tpu.pipeline_mode<synchronous>, transform_indices = @transform_4, window_bounds = array<i64: 1, 64>}, {transform_indices = @transform_5, window_bounds = array<i64: 1, 64, 64>}]} {
    %cst = arith.constant 0.000000e+00 : f32
    %0 = vector.broadcast %cst : f32 to vector<10x10x64xf32>
    %c0 = arith.constant 0 : index
    %c0_0 = arith.constant 0 : index
    %c0_1 = arith.constant 0 : index
    %1 = vector.load %arg7[%c0, %c0_0, %c0_1] : memref<10x10x64xf32, #tpu.memory_space<vmem>>, vector<10x10x64xf32>
    tpu.vector_store %arg7[%c0, %c0_0, %c0_1], %0 {strides = array<i32>} : memref<10x10x64xf32, #tpu.memory_space<vmem>>, vector<10x10x64xf32>,
    %cst_2 = arith.constant 0.000000e+00 : f32
    %2 = vector.broadcast %cst_2 : f32 to vector<10x10x64xf32>
    %c0_3 = arith.constant 0 : index
    %c0_4 = arith.constant 0 : index
    %c0_5 = arith.constant 0 : index
    %3 = vector.load %arg8[%c0_3, %c0_4, %c0_5] : memref<10x10x64xf32, #tpu.memory_space<vmem>>, vector<10x10x64xf32>
    tpu.vector_store %arg8[%c0_3, %c0_4, %c0_5], %2 {strides = array<i32>} : memref<10x10x64xf32, #tpu.memory_space<vmem>>, vector<10x10x64xf32>,
    %c0_6 = arith.constant 0 : index
    %c0_7 = arith.constant 0 : index
    %c0_8 = arith.constant 0 : index
    %4 = vector.load %arg1[%c0_6, %c0_7, %c0_8] : memref<1x64x64xf32, #tpu.memory_space<vmem>>, vector<1x64x64xf32>
    %5 = vector.shape_cast %4 : vector<1x64x64xf32> to vector<64x64xf32>
    %6 = vector.shape_cast %5 : vector<64x64xf32> to vector<8x8x64xf32>
    %c1 = arith.constant 1 : index
    %c1_9 = arith.constant 1 : index
    %c0_10 = arith.constant 0 : index
    %7 = vector.load %arg7[%c1, %c1_9, %c0_10] : memref<10x10x64xf32, #tpu.memory_space<vmem>>, vector<8x8x64xf32>
    tpu.vector_store %arg7[%c1, %c1_9, %c0_10], %6 {strides = array<i32>} : memref<10x10x64xf32, #tpu.memory_space<vmem>>, vector<8x8x64xf32>,
    %c0_11 = arith.constant 0 : index
    %c0_12 = arith.constant 0 : index
    %c0_13 = arith.constant 0 : index
    %8 = vector.load %arg7[%c0_11, %c0_12, %c0_13] : memref<10x10x64xf32, #tpu.memory_space<vmem>>, vector<8x8x64xf32>
    %c0_14 = arith.constant 0 : index
    %c1_15 = arith.constant 1 : index
    %c0_16 = arith.constant 0 : index
    %9 = vector.load %arg7[%c0_14, %c1_15, %c0_16] : memref<10x10x64xf32, #tpu.memory_space<vmem>>, vector<8x8x64xf32>
    %c0_17 = arith.constant 0 : index
    %c2 = arith.constant 2 : index
    %c0_18 = arith.constant 0 : index
    %10 = vector.load %arg7[%c0_17, %c2, %c0_18] : memref<10x10x64xf32, #tpu.memory_space<vmem>>, vector<8x8x64xf32>
    %c1_19 = arith.constant 1 : index
    %c0_20 = arith.constant 0 : index
    %c0_21 = arith.constant 0 : index
    %11 = vector.load %arg7[%c1_19, %c0_20, %c0_21] : memref<10x10x64xf32, #tpu.memory_space<vmem>>, vector<8x8x64xf32>
    %c1_22 = arith.constant 1 : index
    %c1_23 = arith.constant 1 : index
    %c0_24 = arith.constant 0 : index
    %12 = vector.load %arg7[%c1_22, %c1_23, %c0_24] : memref<10x10x64xf32, #tpu.memory_space<vmem>>, vector<8x8x64xf32>
    %c1_25 = arith.constant 1 : index
    %c2_26 = arith.constant 2 : index
    %c0_27 = arith.constant 0 : index
    %13 = vector.load %arg7[%c1_25, %c2_26, %c0_27] : memref<10x10x64xf32, #tpu.memory_space<vmem>>, vector<8x8x64xf32>
    %c2_28 = arith.constant 2 : index
    %c0_29 = arith.constant 0 : index
    %c0_30 = arith.constant 0 : index
    %14 = vector.load %arg7[%c2_28, %c0_29, %c0_30] : memref<10x10x64xf32, #tpu.memory_space<vmem>>, vector<8x8x64xf32>
    %c2_31 = arith.constant 2 : index
    %c1_32 = arith.constant 1 : index
    %c0_33 = arith.constant 0 : index
    %15 = vector.load %arg7[%c2_31, %c1_32, %c0_33] : memref<10x10x64xf32, #tpu.memory_space<vmem>>, vector<8x8x64xf32>
    %c2_34 = arith.constant 2 : index
    %c2_35 = arith.constant 2 : index
    %c0_36 = arith.constant 0 : index
    %16 = vector.load %arg7[%c2_34, %c2_35, %c0_36] : memref<10x10x64xf32, #tpu.memory_space<vmem>>, vector<8x8x64xf32>
    %17 = tpu.concatenate %8, %9, %10, %11, %12, %13, %14, %15, %16 in 2 : vector<8x8x64xf32>, vector<8x8x64xf32>, vector<8x8x64xf32>, vector<8x8x64xf32>, vector<8x8x64xf32>, vector<8x8x64xf32>, vector<8x8x64xf32>, vector<8x8x64xf32>, vector<8x8x64xf32> -> vector<8x8x576xf32>
    %18 = vector.shape_cast %17 : vector<8x8x576xf32> to vector<64x576xf32>
    %c0_37 = arith.constant 0 : index
    %c0_38 = arith.constant 0 : index
    %19 = vector.load %arg2[%c0_37, %c0_38] : memref<576x64xf32, #tpu.memory_space<vmem>>, vector<576x64xf32>
    %cst_39 = arith.constant dense<0.000000e+00> : vector<64x64xf32>
    %20 = tpu.matmul %18, %19, %cst_39 {dimension_numbers = #tpu.dot_dimension_numbers<[1], [0], [0], [1], [0, 0, 1, 1], [], []>} : vector<64x576xf32>, vector<576x64xf32>, vector<64x64xf32> -> vector<64x64xf32>
    %c0_40 = arith.constant 0 : index
    %c0_41 = arith.constant 0 : index
    %21 = vector.load %arg3[%c0_40, %c0_41] : memref<1x64xf32, #tpu.memory_space<vmem>>, vector<1x64xf32>
    %22 = vector.broadcast %21 : vector<1x64xf32> to vector<64x64xf32>
    %23 = arith.addf %20, %22 : vector<64x64xf32>
    %cst_42 = arith.constant 0.000000e+00 : f32
    %24 = vector.broadcast %cst_42 : f32 to vector<64x64xf32>
    %25 = arith.maximumf %23, %24 : vector<64x64xf32>
    %26 = vector.shape_cast %25 : vector<64x64xf32> to vector<8x8x64xf32>
    %c1_43 = arith.constant 1 : index
    %c1_44 = arith.constant 1 : index
    %c0_45 = arith.constant 0 : index
    %27 = vector.load %arg8[%c1_43, %c1_44, %c0_45] : memref<10x10x64xf32, #tpu.memory_space<vmem>>, vector<8x8x64xf32>
    tpu.vector_store %arg8[%c1_43, %c1_44, %c0_45], %26 {strides = array<i32>} : memref<10x10x64xf32, #tpu.memory_space<vmem>>, vector<8x8x64xf32>,
    %c0_46 = arith.constant 0 : index
    %c0_47 = arith.constant 0 : index
    %c0_48 = arith.constant 0 : index
    %28 = vector.load %arg8[%c0_46, %c0_47, %c0_48] : memref<10x10x64xf32, #tpu.memory_space<vmem>>, vector<8x8x64xf32>
    %c0_49 = arith.constant 0 : index
    %c1_50 = arith.constant 1 : index
    %c0_51 = arith.constant 0 : index
    %29 = vector.load %arg8[%c0_49, %c1_50, %c0_51] : memref<10x10x64xf32, #tpu.memory_space<vmem>>, vector<8x8x64xf32>
    %c0_52 = arith.constant 0 : index
    %c2_53 = arith.constant 2 : index
    %c0_54 = arith.constant 0 : index
    %30 = vector.load %arg8[%c0_52, %c2_53, %c0_54] : memref<10x10x64xf32, #tpu.memory_space<vmem>>, vector<8x8x64xf32>
    %c1_55 = arith.constant 1 : index
    %c0_56 = arith.constant 0 : index
    %c0_57 = arith.constant 0 : index
    %31 = vector.load %arg8[%c1_55, %c0_56, %c0_57] : memref<10x10x64xf32, #tpu.memory_space<vmem>>, vector<8x8x64xf32>
    %c1_58 = arith.constant 1 : index
    %c1_59 = arith.constant 1 : index
    %c0_60 = arith.constant 0 : index
    %32 = vector.load %arg8[%c1_58, %c1_59, %c0_60] : memref<10x10x64xf32, #tpu.memory_space<vmem>>, vector<8x8x64xf32>
    %c1_61 = arith.constant 1 : index
    %c2_62 = arith.constant 2 : index
    %c0_63 = arith.constant 0 : index
    %33 = vector.load %arg8[%c1_61, %c2_62, %c0_63] : memref<10x10x64xf32, #tpu.memory_space<vmem>>, vector<8x8x64xf32>
    %c2_64 = arith.constant 2 : index
    %c0_65 = arith.constant 0 : index
    %c0_66 = arith.constant 0 : index
    %34 = vector.load %arg8[%c2_64, %c0_65, %c0_66] : memref<10x10x64xf32, #tpu.memory_space<vmem>>, vector<8x8x64xf32>
    %c2_67 = arith.constant 2 : index
    %c1_68 = arith.constant 1 : index
    %c0_69 = arith.constant 0 : index
    %35 = vector.load %arg8[%c2_67, %c1_68, %c0_69] : memref<10x10x64xf32, #tpu.memory_space<vmem>>, vector<8x8x64xf32>
    %c2_70 = arith.constant 2 : index
    %c2_71 = arith.constant 2 : index
    %c0_72 = arith.constant 0 : index
    %36 = vector.load %arg8[%c2_70, %c2_71, %c0_72] : memref<10x10x64xf32, #tpu.memory_space<vmem>>, vector<8x8x64xf32>
    %37 = tpu.concatenate %28, %29, %30, %31, %32, %33, %34, %35, %36 in 2 : vector<8x8x64xf32>, vector<8x8x64xf32>, vector<8x8x64xf32>, vector<8x8x64xf32>, vector<8x8x64xf32>, vector<8x8x64xf32>, vector<8x8x64xf32>, vector<8x8x64xf32>, vector<8x8x64xf32> -> vector<8x8x576xf32>
    %38 = vector.shape_cast %37 : vector<8x8x576xf32> to vector<64x576xf32>
    %c0_73 = arith.constant 0 : index
    %c0_74 = arith.constant 0 : index
    %39 = vector.load %arg4[%c0_73, %c0_74] : memref<576x64xf32, #tpu.memory_space<vmem>>, vector<576x64xf32>
    %cst_75 = arith.constant dense<0.000000e+00> : vector<64x64xf32>
    %40 = tpu.matmul %38, %39, %cst_75 {dimension_numbers = #tpu.dot_dimension_numbers<[1], [0], [0], [1], [0, 0, 1, 1], [], []>} : vector<64x576xf32>, vector<576x64xf32>, vector<64x64xf32> -> vector<64x64xf32>
    %c0_76 = arith.constant 0 : index
    %c0_77 = arith.constant 0 : index
    %41 = vector.load %arg5[%c0_76, %c0_77] : memref<1x64xf32, #tpu.memory_space<vmem>>, vector<1x64xf32>
    %42 = vector.broadcast %41 : vector<1x64xf32> to vector<64x64xf32>
    %43 = arith.addf %40, %42 : vector<64x64xf32>
    %cst_78 = arith.constant 0.000000e+00 : f32
    %44 = vector.broadcast %cst_78 : f32 to vector<64x64xf32>
    %45 = arith.maximumf %43, %44 : vector<64x64xf32>
    %46 = arith.addf %5, %45 : vector<64x64xf32>
    %47 = vector.shape_cast %46 : vector<64x64xf32> to vector<1x64x64xf32>
    %c0_79 = arith.constant 0 : index
    %c0_80 = arith.constant 0 : index
    %c0_81 = arith.constant 0 : index
    %48 = vector.load %arg6[%c0_79, %c0_80, %c0_81] : memref<1x64x64xf32, #tpu.memory_space<vmem>>, vector<1x64x64xf32>
    tpu.vector_store %arg6[%c0_79, %c0_80, %c0_81], %47 {strides = array<i32>} : memref<1x64x64xf32, #tpu.memory_space<vmem>>, vector<1x64x64xf32>,
    return
  }
  func.func @transform_0(%arg0: i32) -> (i32, i32, i32) {
    %c0_i32 = arith.constant 0 : i32
    %c0_i32_0 = arith.constant 0 : i32
    %c0_i32_1 = arith.constant 0 : i32
    return %arg0, %c0_i32, %c0_i32_0 : i32, i32, i32
  }
  func.func @transform_1(%arg0: i32) -> (i32, i32) {
    %c0_i32 = arith.constant 0 : i32
    %c0_i32_0 = arith.constant 0 : i32
    %c0_i32_1 = arith.constant 0 : i32
    return %c0_i32, %c0_i32_0 : i32, i32
  }
  func.func @transform_2(%arg0: i32) -> (i32, i32) {
    %c0_i32 = arith.constant 0 : i32
    %c0_i32_0 = arith.constant 0 : i32
    %c0_i32_1 = arith.constant 0 : i32
    return %c0_i32, %c0_i32_0 : i32, i32
  }
  func.func @transform_3(%arg0: i32) -> (i32, i32) {
    %c0_i32 = arith.constant 0 : i32
    %c0_i32_0 = arith.constant 0 : i32
    %c0_i32_1 = arith.constant 0 : i32
    return %c0_i32, %c0_i32_0 : i32, i32
  }
  func.func @transform_4(%arg0: i32) -> (i32, i32) {
    %c0_i32 = arith.constant 0 : i32
    %c0_i32_0 = arith.constant 0 : i32
    %c0_i32_1 = arith.constant 0 : i32
    return %c0_i32, %c0_i32_0 : i32, i32
  }
  func.func @transform_5(%arg0: i32) -> (i32, i32, i32) {
    %c0_i32 = arith.constant 0 : i32
    %c0_i32_0 = arith.constant 0 : i32
    %c0_i32_1 = arith.constant 0 : i32
    return %arg0, %c0_i32, %c0_i32_0 : i32, i32, i32
  }
}

</mosaic_0001>

<llo_original>
// kernel: layer_forward.1
$region0: #{layer_forward.1}
  #allocation0 [shape = 'u32[]', space=smem, size = 0x4, offset = 0x4, fixed_abs, tag = 'smem constant byte address 0x4 - core index']
  #allocation1 [shape = 'u32[144,128]{1,0:T(1,128)}', space=vmem, size = 0x12000, scoped, tag = 'internal scratch']
  #allocation2 [shape = 'f32[10,10,64]{2,1,0:T(8,128)}', space=vmem, size = 0x14000, scoped, tag = 'scratch operand']
  #allocation3 [shape = 'f32[10,10,64]{2,1,0:T(8,128)}', space=vmem, size = 0x14000, scoped, tag = 'scratch operand']
  %s0 = inlined_call_operand.vmem [shape: f32[2,64,64], index: 0, kind: input, shape index: {}]
  %s1 = inlined_call_operand.vmem [shape: f32[576,64], index: 1, kind: input, shape index: {}]
  %s2 = inlined_call_operand.vmem [shape: f32[1,64], index: 2, kind: input, shape index: {}]
  %s3 = inlined_call_operand.vmem [shape: f32[576,64], index: 3, kind: input, shape index: {}]
  %s4 = inlined_call_operand.vmem [shape: f32[1,64], index: 4, kind: input, shape index: {}]
  %s5 = inlined_call_operand.vmem [shape: f32[2,64,64], index: 5, kind: output, shape index: {}]
  %s6 = sld [smem:[#allocation0]]
  $region53: #{layer_forward.1} parent=0
    _
  %s8 = ssub.s32 1, %s6
  %s9 = scalar_select 0, %s8, %s6
  loop: start=0, step=1, limit=4
  $region2: #{layer_forward.1} parent=0 // loop_pre_header
    _
  $region3: #{layer_forward.1} parent=0 // loop_header
    %s11 = sphi 0, %s15
    %p12 = scmp.ge.s32.totalorder %s11, 4
    %s21 = sphi 0, %s23
    %s24 = sphi 0, %s21
    %s25 = sphi 0, %s24
    %s41 = sphi 0, %s25
    %s45 = sphi 0, %s45
    %s47 = sphi 0, %s45
    %s48 = sphi 0, %s47
    %s62 = sphi 0, %s48
    %s66 = sphi 0, %s66
    %s68 = sphi 0, %s66
    %s69 = sphi 0, %s68
    %s83 = sphi 0, %s69
    %s87 = sphi 0, %s87
    %s89 = sphi 0, %s87
    %s90 = sphi 0, %s89
    %s104 = sphi 0, %s90
    %s108 = sphi 0, %s108
    %s110 = sphi 0, %s108
    %s111 = sphi 0, %s110
    %s125 = sphi 0, %s111
    %s131 = sphi 0, %s133
    %s134 = sphi 0, %s131
    %s135 = sphi 0, %s134
    %s151 = sphi 0, %s135
  $region4: #{layer_forward.1} parent=0 // loop_header_branch
    %14 = sbr.rel (%p12) target = $region8
  $region5: #{layer_forward.1} parent=0 // loop_body
    %s16 = ssub.s32 %s11, 1
    %s17 = ssub.s32 %s11, 2
    %s18 = sadd.s32 %s11, 1
    %s19 = ssub.s32 %s11, %s18
    %p20 = scmp.eq.s32.totalorder %s19, 0
    %s22 = sadd.s32 %s21, 1
    %s23 = scalar_select %p20, %s21, %s22
    %p26 = pneg %p20
    %p27 = scmp.eq.s32.totalorder %s11, 1
    %p28 = por %p26, %p27
    %p29 = scmp.ne.s32.totalorder %s21, %s24
    %p30 = scmp.eq.s32.totalorder %s11, 0
    %p31 = por %p29, %p30
    %p32 = scmp.ne.s32.totalorder %s21, %s24
    %p33 = scmp.eq.s32.totalorder %s16, 1
    %p34 = por %p32, %p33
    %p35 = scmp.ne.s32.totalorder %s24, %s25
    %p36 = scmp.eq.s32.totalorder %s16, 0
    %p37 = por %p35, %p36
    %p38 = scmp.ne.s32.totalorder %s24, %s25
    %p39 = scmp.eq.s32.totalorder %s17, 1
    %p40 = por %p38, %p39
    %p42 = scmp.ne.s32.totalorder %s25, %s41
    %p43 = scmp.eq.s32.totalorder %s17, 0
    %p44 = por %p42, %p43
    %s46 = sadd.s32 %s45, 1
    %p49 = scmp.eq.s32.totalorder %s11, 1
    %p50 = scmp.ne.s32.totalorder %s45, %s47
    %p51 = scmp.eq.s32.totalorder %s11, 0
    %p52 = por %p50, %p51
    %p53 = scmp.ne.s32.totalorder %s45, %s47
    %p54 = scmp.eq.s32.totalorder %s16, 1
    %p55 = por %p53, %p54
    %p56 = scmp.ne.s32.totalorder %s47, %s48
    %p57 = scmp.eq.s32.totalorder %s16, 0
    %p58 = por %p56, %p57
    %p59 = scmp.ne.s32.totalorder %s47, %s48
    %p60 = scmp.eq.s32.totalorder %s17, 1
    %p61 = por %p59, %p60
    %p63 = scmp.ne.s32.totalorder %s48, %s62
    %p64 = scmp.eq.s32.totalorder %s17, 0
    %p65 = por %p63, %p64
    %s67 = sadd.s32 %s66, 1
    %p70 = scmp.eq.s32.totalorder %s11, 1
    %p71 = scmp.ne.s32.totalorder %s66, %s68
    %p72 = scmp.eq.s32.totalorder %s11, 0
    %p73 = por %p71, %p72
    %p74 = scmp.ne.s32.totalorder %s66, %s68
    %p75 = scmp.eq.s32.totalorder %s16, 1
    %p76 = por %p74, %p75
    %p77 = scmp.ne.s32.totalorder %s68, %s69
    %p78 = scmp.eq.s32.totalorder %s16, 0
    %p79 = por %p77, %p78
    %p80 = scmp.ne.s32.totalorder %s68, %s69
    %p81 = scmp.eq.s32.totalorder %s17, 1
    %p82 = por %p80, %p81
    %p84 = scmp.ne.s32.totalorder %s69, %s83
    %p85 = scmp.eq.s32.totalorder %s17, 0
    %p86 = por %p84, %p85
    %s88 = sadd.s32 %s87, 1
    %p91 = scmp.eq.s32.totalorder %s11, 1
    %p92 = scmp.ne.s32.totalorder %s87, %s89
    %p93 = scmp.eq.s32.totalorder %s11, 0
    %p94 = por %p92, %p93
    %p95 = scmp.ne.s32.totalorder %s87, %s89
    %p96 = scmp.eq.s32.totalorder %s16, 1
    %p97 = por %p95, %p96
    %p98 = scmp.ne.s32.totalorder %s89, %s90
    %p99 = scmp.eq.s32.totalorder %s16, 0
    %p100 = por %p98, %p99
    %p101 = scmp.ne.s32.totalorder %s89, %s90
    %p102 = scmp.eq.s32.totalorder %s17, 1
    %p103 = por %p101, %p102
    %p105 = scmp.ne.s32.totalorder %s90, %s104
    %p106 = scmp.eq.s32.totalorder %s17, 0
    %p107 = por %p105, %p106
    %s109 = sadd.s32 %s108, 1
    %p112 = scmp.eq.s32.totalorder %s11, 1
    %p113 = scmp.ne.s32.totalorder %s108, %s110
    %p114 = scmp.eq.s32.totalorder %s11, 0
    %p115 = por %p113, %p114
    %p116 = scmp.ne.s32.totalorder %s108, %s110
    %p117 = scmp.eq.s32.totalorder %s16, 1
    %p118 = por %p116, %p117
    %p119 = scmp.ne.s32.totalorder %s110, %s111
    %p120 = scmp.eq.s32.totalorder %s16, 0
    %p121 = por %p119, %p120
    %p122 = scmp.ne.s32.totalorder %s110, %s111
    %p123 = scmp.eq.s32.totalorder %s17, 1
    %p124 = por %p122, %p123
    %p126 = scmp.ne.s32.totalorder %s111, %s125
    %p127 = scmp.eq.s32.totalorder %s17, 0
    %p128 = por %p126, %p127
    %s129 = ssub.s32 %s11, %s18
    %p130 = scmp.eq.s32.totalorder %s129, 0
    %s132 = sadd.s32 %s131, 1
    %s133 = scalar_select %p130, %s131, %s132
    %p136 = pneg %p130
    %p137 = scmp.eq.s32.totalorder %s11, 1
    %p138 = por %p136, %p137
    %p139 = scmp.ne.s32.totalorder %s131, %s134
    %p140 = scmp.eq.s32.totalorder %s11, 0
    %p141 = por %p139, %p140
    %p142 = scmp.ne.s32.totalorder %s131, %s134
    %p143 = scmp.eq.s32.totalorder %s16, 1
    %p144 = por %p142, %p143
    %p145 = scmp.ne.s32.totalorder %s134, %s135
    %p146 = scmp.eq.s32.totalorder %s16, 0
    %p147 = por %p145, %p146
    %p148 = scmp.ne.s32.totalorder %s134, %s135
    %p149 = scmp.eq.s32.totalorder %s17, 1
    %p150 = por %p148, %p149
    %p152 = scmp.ne.s32.totalorder %s135, %s151
    %p153 = scmp.eq.s32.totalorder %s17, 0
    %p154 = por %p152, %p153
    %p155 = scmp.le.s32.totalorder 1, %s11
    %p156 = scmp.lt.s32.totalorder %s11, 3
    %p157 = pnand %p155, %p156
    %p158 = pneg %p157
    // Predicated region
    $region9: #{layer_forward.1} parent=5 // pred_check
      _
    $region10: #{layer_forward.1} parent=5 // pred_check_branch
      %160 = sbr.rel (%p157) target = $region12
    $region11: #{layer_forward.1} parent=5 // pred_region
      %s161 = ssub.s32 %s11, 1
      // Predicated region
      $region13: #{layer_forward.1} parent=11 // pred_check
        %p162 = pneg %p58
      $region14: #{layer_forward.1} parent=11 // pred_check_branch
        %164 = sbr.rel (%p162) target = $region16
      $region15: #{layer_forward.1} parent=11 // pred_region
        _
      $region16: #{layer_forward.1} parent=11 // pred_fallthru
        _
      // Predicated region
      $region17: #{layer_forward.1} parent=11 // pred_check
        %p165 = pneg %p79
      $region18: #{layer_forward.1} parent=11 // pred_check_branch
        %167 = sbr.rel (%p165) target = $region20
      $region19: #{layer_forward.1} parent=11 // pred_region
        _
      $region20: #{layer_forward.1} parent=11 // pred_fallthru
        _
      // Predicated region
      $region21: #{layer_forward.1} parent=11 // pred_check
        %p168 = pneg %p100
      $region22: #{layer_forward.1} parent=11 // pred_check_branch
        %170 = sbr.rel (%p168) target = $region24
      $region23: #{layer_forward.1} parent=11 // pred_region
        _
      $region24: #{layer_forward.1} parent=11 // pred_fallthru
        _
      // Predicated region
      $region25: #{layer_forward.1} parent=11 // pred_check
        %p171 = pneg %p121
      $region26: #{layer_forward.1} parent=11 // pred_check_branch
        %173 = sbr.rel (%p171) target = $region28
      $region27: #{layer_forward.1} parent=11 // pred_region
        _
      $region28: #{layer_forward.1} parent=11 // pred_fallthru
        _
    $region12: #{layer_forward.1} parent=5 // pred_fallthru
      _
    %p174 = scmp.lt.s32.totalorder %s11, 2
    // Predicated region
    $region29: #{layer_forward.1} parent=5 // pred_check
      %p175 = pneg %p174
    $region30: #{layer_forward.1} parent=5 // pred_check_branch
      %177 = sbr.rel (%p175) target = $region32
    $region31: #{layer_forward.1} parent=5 // pred_region
      // Predicated region
      $region33: #{layer_forward.1} parent=31 // pred_check
        %p178 = pneg %p31
      $region34: #{layer_forward.1} parent=31 // pred_check_branch
        %180 = sbr.rel (%p178) target = $region36
      $region35: #{layer_forward.1} parent=31 // pred_region
        %p181 = scmp.lt.s32.totalorder %s11, 1
        %s182 = scalar_select %p181, %s11, 1
        %s183 = smul.addr %s182, 8
        %s184 = smul.addr %s183, 8
        %s185 = scalar_lea.vmem %s0, %s184
      $region36: #{layer_forward.1} parent=31 // pred_fallthru
        _
    $region32: #{layer_forward.1} parent=5 // pred_fallthru
      _
    %p186 = scmp.le.s32.totalorder 1, %s11
    %p187 = scmp.lt.s32.totalorder %s11, 3
    %p188 = pnand %p186, %p187
    %p189 = pneg %p188
    // Predicated region
    $region37: #{layer_forward.1} parent=5 // pred_check
      _
    $region38: #{layer_forward.1} parent=5 // pred_check_branch
      %191 = sbr.rel (%p188) target = $region40
    $region39: #{layer_forward.1} parent=5 // pred_region
      %s192 = ssub.s32 %s11, 1
      %p193 = scmp.lt.s32.totalorder %s16, 1
      %s194 = scalar_select %p193, %s16, 1
      %s195 = smul.addr %s194, 8
      %s196 = smul.addr %s195, 8
      %s197 = scalar_lea.vmem %s0, %s196
      %p198 = pneg %p37
      %p199 = pneg %p34
      %p200 = pneg %p58
      %p201 = pneg %p55
      %p202 = pneg %p79
      %p203 = pneg %p76
      %p204 = pneg %p100
      %p205 = pneg %p97
      %p206 = pneg %p121
      %p207 = pneg %p118
      %p208 = pneg %p147
      %p209 = pneg %p144
      %p210 = scmp.lt.s32.totalorder %s16, 1
      %s211 = scalar_select %p210, %s16, 1
      %s212 = smul.addr %s211, 8
      %s213 = smul.addr %s212, 8
      %s214 = scalar_lea.vmem %s5, %s213
      %p215 = scmp.lt.s32.totalorder %s16, 1
      %s216 = scalar_select %p215, %s16, 1
      %s217 = smul.addr %s216, 8
      %s218 = smul.addr %s217, 8
      %s219 = scalar_lea.vmem %s0, %s218
      %p220 = scmp.lt.s32.totalorder %s16, 1
      %s221 = scalar_select %p220, %s16, 1
      %s222 = smul.addr %s221, 8
      %s223 = smul.addr %s222, 8
      %s224 = scalar_lea.vmem %s5, %s223
      %vm225 = vcmask 523264
      %226 = vst.msk [vmem:[#allocation2] sm:$0xff] %vm225, 0.0
      %vm227 = vcmask 517120
      %228 = vst.msk [vmem:[#allocation2 + $0x8] sm:$0x3] %vm227, 0.0
      %229 = vst.msk [vmem:[#allocation2 + $0x10] sm:$0xff] %vm225, 0.0
      %230 = vst.msk [vmem:[#allocation2 + $0x18] sm:$0x3] %vm227, 0.0
      %231 = vst.msk [vmem:[#allocation2 + $0x20] sm:$0xff] %vm225, 0.0
      %232 = vst.msk [vmem:[#allocation2 + $0x28] sm:$0x3] %vm227, 0.0
      %233 = vst.msk [vmem:[#allocation2 + $0x30] sm:$0xff] %vm225, 0.0
      %234 = vst.msk [vmem:[#allocation2 + $0x38] sm:$0x3] %vm227, 0.0
      %235 = vst.msk [vmem:[#allocation2 + $0x40] sm:$0xff] %vm225, 0.0
      %236 = vst.msk [vmem:[#allocation2 + $0x48] sm:$0x3] %vm227, 0.0
      %237 = vst.msk [vmem:[#allocation2 + $0x50] sm:$0xff] %vm225, 0.0
      %238 = vst.msk [vmem:[#allocation2 + $0x58] sm:$0x3] %vm227, 0.0
      %239 = vst.msk [vmem:[#allocation2 + $0x60] sm:$0xff] %vm225, 0.0
      %240 = vst.msk [vmem:[#allocation2 + $0x68] sm:$0x3] %vm227, 0.0
      %241 = vst.msk [vmem:[#allocation2 + $0x70] sm:$0xff] %vm225, 0.0
      %242 = vst.msk [vmem:[#allocation2 + $0x78] sm:$0x3] %vm227, 0.0
      %243 = vst.msk [vmem:[#allocation2 + $0x80] sm:$0xff] %vm225, 0.0
      %244 = vst.msk [vmem:[#allocation2 + $0x88] sm:$0x3] %vm227, 0.0
      %245 = vst.msk [vmem:[#allocation2 + $0x90] sm:$0xff] %vm225, 0.0
      %246 = vst.msk [vmem:[#allocation2 + $0x98] sm:$0x3] %vm227, 0.0
      %247 = vst.msk [vmem:[#allocation3] sm:$0xff] %vm225, 0.0
      %248 = vst.msk [vmem:[#allocation3 + $0x8] sm:$0x3] %vm227, 0.0
      %249 = vst.msk [vmem:[#allocation3 + $0x10] sm:$0xff] %vm225, 0.0
      %250 = vst.msk [vmem:[#allocation3 + $0x18] sm:$0x3] %vm227, 0.0
      %251 = vst.msk [vmem:[#allocation3 + $0x20] sm:$0xff] %vm225, 0.0
      %252 = vst.msk [vmem:[#allocation3 + $0x28] sm:$0x3] %vm227, 0.0
      %253 = vst.msk [vmem:[#allocation3 + $0x30] sm:$0xff] %vm225, 0.0
      %254 = vst.msk [vmem:[#allocation3 + $0x38] sm:$0x3] %vm227, 0.0
      %255 = vst.msk [vmem:[#allocation3 + $0x40] sm:$0xff] %vm225, 0.0
      %256 = vst.msk [vmem:[#allocation3 + $0x48] sm:$0x3] %vm227, 0.0
      %257 = vst.msk [vmem:[#allocation3 + $0x50] sm:$0xff] %vm225, 0.0
      %258 = vst.msk [vmem:[#allocation3 + $0x58] sm:$0x3] %vm227, 0.0
      %259 = vst.msk [vmem:[#allocation3 + $0x60] sm:$0xff] %vm225, 0.0
      %260 = vst.msk [vmem:[#allocation3 + $0x68] sm:$0x3] %vm227, 0.0
      %261 = vst.msk [vmem:[#allocation3 + $0x70] sm:$0xff] %vm225, 0.0
      %262 = vst.msk [vmem:[#allocation3 + $0x78] sm:$0x3] %vm227, 0.0
      %263 = vst.msk [vmem:[#allocation3 + $0x80] sm:$0xff] %vm225, 0.0
      %264 = vst.msk [vmem:[#allocation3 + $0x88] sm:$0x3] %vm227, 0.0
      %265 = vst.msk [vmem:[#allocation3 + $0x90] sm:$0xff] %vm225, 0.0
      %266 = vst.msk [vmem:[#allocation3 + $0x98] sm:$0x3] %vm227, 0.0
      %v267 = vld [vmem:[%s219] sm:$0xff]
      %v268 = vld [vmem:[%s219 + $0x8] sm:$0xff]
      %v269 = vld [vmem:[%s219 + $0x10] sm:$0xff]
      %v270 = vld [vmem:[%s219 + $0x18] sm:$0xff]
      %v271 = vld [vmem:[%s219 + $0x20] sm:$0xff]
      %v272 = vld [vmem:[%s219 + $0x28] sm:$0xff]
      %v273 = vld [vmem:[%s219 + $0x30] sm:$0xff]
      %v274 = vld [vmem:[%s219 + $0x38] sm:$0xff]
      %s275 = scalar_lea.vmem [#allocation2], 16
      %276 = vst.msk [vmem:[%s275 + $0x1] sm:$0xff] %vm225, %v267
      %277 = vst.msk [vmem:[%s275 + $0x11] sm:$0xff] %vm225, %v268
      %278 = vst.msk [vmem:[%s275 + $0x21] sm:$0xff] %vm225, %v269
      %279 = vst.msk [vmem:[%s275 + $0x31] sm:$0xff] %vm225, %v270
      %280 = vst.msk [vmem:[%s275 + $0x41] sm:$0xff] %vm225, %v271
      %281 = vst.msk [vmem:[%s275 + $0x51] sm:$0xff] %vm225, %v272
      %282 = vst.msk [vmem:[%s275 + $0x61] sm:$0xff] %vm225, %v273
      %283 = vst.msk [vmem:[%s275 + $0x71] sm:$0xff] %vm225, %v274
      %v284 = vld [vmem:[#allocation2] sm:$0xff]
      %v285 = vld [vmem:[#allocation2 + $0x10] sm:$0xff]
      %v286 = vld [vmem:[#allocation2 + $0x20] sm:$0xff]
      %v287 = vld [vmem:[#allocation2 + $0x30] sm:$0xff]
      %v288 = vld [vmem:[#allocation2 + $0x40] sm:$0xff]
      %v289 = vld [vmem:[#allocation2 + $0x50] sm:$0xff]
      %v290 = vld [vmem:[#allocation2 + $0x60] sm:$0xff]
      %v291 = vld [vmem:[#allocation2 + $0x70] sm:$0xff]
      %v292 = vld [vmem:[#allocation2 + $0x1] sm:$0xff]
      %v293 = vld [vmem:[#allocation2 + $0x11] sm:$0xff]
      %v294 = vld [vmem:[#allocation2 + $0x21] sm:$0xff]
      %v295 = vld [vmem:[#allocation2 + $0x31] sm:$0xff]
      %v296 = vld [vmem:[#allocation2 + $0x41] sm:$0xff]
      %v297 = vld [vmem:[#allocation2 + $0x51] sm:$0xff]
      %v298 = vld [vmem:[#allocation2 + $0x61] sm:$0xff]
      %v299 = vld [vmem:[#allocation2 + $0x71] sm:$0xff]
      %v300 = vld [vmem:[#allocation2 + $0x2] sm:$0xff]
      %v301 = vld [vmem:[#allocation2 + $0x12] sm:$0xff]
      %v302 = vld [vmem:[#allocation2 + $0x22] sm:$0xff]
      %v303 = vld [vmem:[#allocation2 + $0x32] sm:$0xff]
      %v304 = vld [vmem:[#allocation2 + $0x42] sm:$0xff]
      %v305 = vld [vmem:[#allocation2 + $0x52] sm:$0xff]
      %v306 = vld [vmem:[#allocation2 + $0x62] sm:$0xff]
      %v307 = vld [vmem:[#allocation2 + $0x72] sm:$0xff]
      %v308 = vld [vmem:[%s275] sm:$0xff]
      %v309 = vld [vmem:[%s275 + $0x10] sm:$0xff]
      %v310 = vld [vmem:[%s275 + $0x20] sm:$0xff]
      %v311 = vld [vmem:[%s275 + $0x30] sm:$0xff]
      %v312 = vld [vmem:[%s275 + $0x40] sm:$0xff]
      %v313 = vld [vmem:[%s275 + $0x50] sm:$0xff]
      %v314 = vld [vmem:[%s275 + $0x60] sm:$0xff]
      %v315 = vld [vmem:[%s275 + $0x70] sm:$0xff]
      %v316 = vld [vmem:[%s275 + $0x1] sm:$0xff]
      %v317 = vld [vmem:[%s275 + $0x11] sm:$0xff]
      %v318 = vld [vmem:[%s275 + $0x21] sm:$0xff]
      %v319 = vld [vmem:[%s275 + $0x31] sm:$0xff]
      %v320 = vld [vmem:[%s275 + $0x41] sm:$0xff]
      %v321 = vld [vmem:[%s275 + $0x51] sm:$0xff]
      %v322 = vld [vmem:[%s275 + $0x61] sm:$0xff]
      %v323 = vld [vmem:[%s275 + $0x71] sm:$0xff]
      %v324 = vld [vmem:[%s275 + $0x2] sm:$0xff]
      %v325 = vld [vmem:[%s275 + $0x12] sm:$0xff]
      %v326 = vld [vmem:[%s275 + $0x22] sm:$0xff]
      %v327 = vld [vmem:[%s275 + $0x32] sm:$0xff]
      %v328 = vld [vmem:[%s275 + $0x42] sm:$0xff]
      %v329 = vld [vmem:[%s275 + $0x52] sm:$0xff]
      %v330 = vld [vmem:[%s275 + $0x62] sm:$0xff]
      %v331 = vld [vmem:[%s275 + $0x72] sm:$0xff]
      %s332 = scalar_lea.vmem [#allocation2], 32
      %v333 = vld [vmem:[%s332] sm:$0xff]
      %v334 = vld [vmem:[%s332 + $0x10] sm:$0xff]
      %v335 = vld [vmem:[%s332 + $0x20] sm:$0xff]
      %v336 = vld [vmem:[%s332 + $0x30] sm:$0xff]
      %v337 = vld [vmem:[%s332 + $0x40] sm:$0xff]
      %v338 = vld [vmem:[%s332 + $0x50] sm:$0xff]
      %v339 = vld [vmem:[%s332 + $0x60] sm:$0xff]
      %v340 = vld [vmem:[%s332 + $0x70] sm:$0xff]
      %v341 = vld [vmem:[%s332 + $0x1] sm:$0xff]
      %v342 = vld [vmem:[%s332 + $0x11] sm:$0xff]
      %v343 = vld [vmem:[%s332 + $0x21] sm:$0xff]
      %v344 = vld [vmem:[%s332 + $0x31] sm:$0xff]
      %v345 = vld [vmem:[%s332 + $0x41] sm:$0xff]
      %v346 = vld [vmem:[%s332 + $0x51] sm:$0xff]
      %v347 = vld [vmem:[%s332 + $0x61] sm:$0xff]
      %v348 = vld [vmem:[%s332 + $0x71] sm:$0xff]
      %v349 = vld [vmem:[%s332 + $0x2] sm:$0xff]
      %v350 = vld [vmem:[%s332 + $0x12] sm:$0xff]
      %v351 = vld [vmem:[%s332 + $0x22] sm:$0xff]
      %v352 = vld [vmem:[%s332 + $0x32] sm:$0xff]
      %v353 = vld [vmem:[%s332 + $0x42] sm:$0xff]
      %v354 = vld [vmem:[%s332 + $0x52] sm:$0xff]
      %v355 = vld [vmem:[%s332 + $0x62] sm:$0xff]
      %v356 = vld [vmem:[%s332 + $0x72] sm:$0xff]
      %365 = vrot.lane.b32.xlu0 %v292, 64
      %v366 = vpop.permute.xlu0 %365
      %367 = vrot.lane.b32.xlu0 %v293, 64
      %v368 = vpop.permute.xlu0 %367
      %369 = vrot.lane.b32.xlu0 %v294, 64
      %v370 = vpop.permute.xlu0 %369
      %371 = vrot.lane.b32.xlu0 %v295, 64
      %v372 = vpop.permute.xlu0 %371
      %373 = vrot.lane.b32.xlu0 %v296, 64
      %v374 = vpop.permute.xlu0 %373
      %375 = vrot.lane.b32.xlu0 %v297, 64
      %v376 = vpop.permute.xlu0 %375
      %377 = vrot.lane.b32.xlu0 %v298, 64
      %v378 = vpop.permute.xlu0 %377
      %379 = vrot.lane.b32.xlu0 %v299, 64
      %v380 = vpop.permute.xlu0 %379
      %397 = vrot.lane.b32.xlu0 %v308, 64
      %v398 = vpop.permute.xlu0 %397
      %399 = vrot.lane.b32.xlu0 %v309, 64
      %v400 = vpop.permute.xlu0 %399
      %401 = vrot.lane.b32.xlu0 %v310, 64
      %v402 = vpop.permute.xlu0 %401
      %403 = vrot.lane.b32.xlu0 %v311, 64
      %v404 = vpop.permute.xlu0 %403
      %405 = vrot.lane.b32.xlu0 %v312, 64
      %v406 = vpop.permute.xlu0 %405
      %407 = vrot.lane.b32.xlu0 %v313, 64
      %v408 = vpop.permute.xlu0 %407
      %409 = vrot.lane.b32.xlu0 %v314, 64
      %v410 = vpop.permute.xlu0 %409
      %411 = vrot.lane.b32.xlu0 %v315, 64
      %v412 = vpop.permute.xlu0 %411
      %429 = vrot.lane.b32.xlu0 %v324, 64
      %v430 = vpop.permute.xlu0 %429
      %431 = vrot.lane.b32.xlu0 %v325, 64
      %v432 = vpop.permute.xlu0 %431
      %433 = vrot.lane.b32.xlu0 %v326, 64
      %v434 = vpop.permute.xlu0 %433
      %435 = vrot.lane.b32.xlu0 %v327, 64
      %v436 = vpop.permute.xlu0 %435
      %437 = vrot.lane.b32.xlu0 %v328, 64
      %v438 = vpop.permute.xlu0 %437
      %439 = vrot.lane.b32.xlu0 %v329, 64
      %v440 = vpop.permute.xlu0 %439
      %441 = vrot.lane.b32.xlu0 %v330, 64
      %v442 = vpop.permute.xlu0 %441
      %443 = vrot.lane.b32.xlu0 %v331, 64
      %v444 = vpop.permute.xlu0 %443
      %461 = vrot.lane.b32.xlu0 %v341, 64
      %v462 = vpop.permute.xlu0 %461
      %463 = vrot.lane.b32.xlu0 %v342, 64
      %v464 = vpop.permute.xlu0 %463
      %465 = vrot.lane.b32.xlu0 %v343, 64
      %v466 = vpop.permute.xlu0 %465
      %467 = vrot.lane.b32.xlu0 %v344, 64
      %v468 = vpop.permute.xlu0 %467
      %469 = vrot.lane.b32.xlu0 %v345, 64
      %v470 = vpop.permute.xlu0 %469
      %471 = vrot.lane.b32.xlu0 %v346, 64
      %v472 = vpop.permute.xlu0 %471
      %473 = vrot.lane.b32.xlu0 %v347, 64
      %v474 = vpop.permute.xlu0 %473
      %475 = vrot.lane.b32.xlu0 %v348, 64
      %v476 = vpop.permute.xlu0 %475
      %v485 = vsel %vm225, %v284, %v366
      %v486 = vsel %vm225, %v285, %v368
      %v487 = vsel %vm225, %v286, %v370
      %v488 = vsel %vm225, %v287, %v372
      %v489 = vsel %vm225, %v288, %v374
      %v490 = vsel %vm225, %v289, %v376
      %v491 = vsel %vm225, %v290, %v378
      %v492 = vsel %vm225, %v291, %v380
      %v493 = vsel %vm225, %v300, %v398
      %v494 = vsel %vm225, %v301, %v400
      %v495 = vsel %vm225, %v302, %v402
      %v496 = vsel %vm225, %v303, %v404
      %v497 = vsel %vm225, %v304, %v406
      %v498 = vsel %vm225, %v305, %v408
      %v499 = vsel %vm225, %v306, %v410
      %v500 = vsel %vm225, %v307, %v412
      %v501 = vsel %vm225, %v316, %v430
      %v502 = vsel %vm225, %v317, %v432
      %v503 = vsel %vm225, %v318, %v434
      %v504 = vsel %vm225, %v319, %v436
      %v505 = vsel %vm225, %v320, %v438
      %v506 = vsel %vm225, %v321, %v440
      %v507 = vsel %vm225, %v322, %v442
      %v508 = vsel %vm225, %v323, %v444
      %v509 = vsel %vm225, %v333, %v462
      %v510 = vsel %vm225, %v334, %v464
      %v511 = vsel %vm225, %v335, %v466
      %v512 = vsel %vm225, %v336, %v468
      %v513 = vsel %vm225, %v337, %v470
      %v514 = vsel %vm225, %v338, %v472
      %v515 = vsel %vm225, %v339, %v474
      %v516 = vsel %vm225, %v340, %v476
      %v517 = vld [vmem:[%s1] sm:$0xff]
      %v518 = vld [vmem:[%s1 + $0x8] sm:$0xff]
      %v519 = vld [vmem:[%s1 + $0x10] sm:$0xff]
      %v520 = vld [vmem:[%s1 + $0x18] sm:$0xff]
      %v521 = vld [vmem:[%s1 + $0x20] sm:$0xff]
      %v522 = vld [vmem:[%s1 + $0x28] sm:$0xff]
      %v523 = vld [vmem:[%s1 + $0x30] sm:$0xff]
      %v524 = vld [vmem:[%s1 + $0x38] sm:$0xff]
      %v525 = vld [vmem:[%s1 + $0x40] sm:$0xff]
      %v526 = vld [vmem:[%s1 + $0x48] sm:$0xff]
      %v527 = vld [vmem:[%s1 + $0x50] sm:$0xff]
      %v528 = vld [vmem:[%s1 + $0x58] sm:$0xff]
      %v529 = vld [vmem:[%s1 + $0x60] sm:$0xff]
      %v530 = vld [vmem:[%s1 + $0x68] sm:$0xff]
      %v531 = vld [vmem:[%s1 + $0x70] sm:$0xff]
      %v532 = vld [vmem:[%s1 + $0x78] sm:$0xff]
      %v533 = vld [vmem:[%s1 + $0x80] sm:$0xff]
      %v534 = vld [vmem:[%s1 + $0x88] sm:$0xff]
      %v535 = vld [vmem:[%s1 + $0x90] sm:$0xff]
      %v536 = vld [vmem:[%s1 + $0x98] sm:$0xff]
      %v537 = vld [vmem:[%s1 + $0xa0] sm:$0xff]
      %v538 = vld [vmem:[%s1 + $0xa8] sm:$0xff]
      %v539 = vld [vmem:[%s1 + $0xb0] sm:$0xff]
      %v540 = vld [vmem:[%s1 + $0xb8] sm:$0xff]
      %v541 = vld [vmem:[%s1 + $0xc0] sm:$0xff]
      %v542 = vld [vmem:[%s1 + $0xc8] sm:$0xff]
      %v543 = vld [vmem:[%s1 + $0xd0] sm:$0xff]
      %v544 = vld [vmem:[%s1 + $0xd8] sm:$0xff]
      %v545 = vld [vmem:[%s1 + $0xe0] sm:$0xff]
      %v546 = vld [vmem:[%s1 + $0xe8] sm:$0xff]
      %v547 = vld [vmem:[%s1 + $0xf0] sm:$0xff]
      %v548 = vld [vmem:[%s1 + $0xf8] sm:$0xff]
      %v549 = vld [vmem:[%s1 + $0x100] sm:$0xff]
      %v550 = vld [vmem:[%s1 + $0x108] sm:$0xff]
      %v551 = vld [vmem:[%s1 + $0x110] sm:$0xff]
      %v552 = vld [vmem:[%s1 + $0x118] sm:$0xff]
      %v553 = vld [vmem:[%s1 + $0x120] sm:$0xff]
      %v554 = vld [vmem:[%s1 + $0x128] sm:$0xff]
      %v555 = vld [vmem:[%s1 + $0x130] sm:$0xff]
      %v556 = vld [vmem:[%s1 + $0x138] sm:$0xff]
      %v557 = vld [vmem:[%s1 + $0x140] sm:$0xff]
      %v558 = vld [vmem:[%s1 + $0x148] sm:$0xff]
      %v559 = vld [vmem:[%s1 + $0x150] sm:$0xff]
      %v560 = vld [vmem:[%s1 + $0x158] sm:$0xff]
      %v561 = vld [vmem:[%s1 + $0x160] sm:$0xff]
      %v562 = vld [vmem:[%s1 + $0x168] sm:$0xff]
      %v563 = vld [vmem:[%s1 + $0x170] sm:$0xff]
      %v564 = vld [vmem:[%s1 + $0x178] sm:$0xff]
      %v565 = vld [vmem:[%s1 + $0x180] sm:$0xff]
      %v566 = vld [vmem:[%s1 + $0x188] sm:$0xff]
      %v567 = vld [vmem:[%s1 + $0x190] sm:$0xff]
      %v568 = vld [vmem:[%s1 + $0x198] sm:$0xff]
      %v569 = vld [vmem:[%s1 + $0x1a0] sm:$0xff]
      %v570 = vld [vmem:[%s1 + $0x1a8] sm:$0xff]
      %v571 = vld [vmem:[%s1 + $0x1b0] sm:$0xff]
      %v572 = vld [vmem:[%s1 + $0x1b8] sm:$0xff]
      %v573 = vld [vmem:[%s1 + $0x1c0] sm:$0xff]
      %v574 = vld [vmem:[%s1 + $0x1c8] sm:$0xff]
      %v575 = vld [vmem:[%s1 + $0x1d0] sm:$0xff]
      %v576 = vld [vmem:[%s1 + $0x1d8] sm:$0xff]
      %v577 = vld [vmem:[%s1 + $0x1e0] sm:$0xff]
      %v578 = vld [vmem:[%s1 + $0x1e8] sm:$0xff]
      %v579 = vld [vmem:[%s1 + $0x1f0] sm:$0xff]
      %v580 = vld [vmem:[%s1 + $0x1f8] sm:$0xff]
      %v581 = vld [vmem:[%s1 + $0x200] sm:$0xff]
      %v582 = vld [vmem:[%s1 + $0x208] sm:$0xff]
      %v583 = vld [vmem:[%s1 + $0x210] sm:$0xff]
      %v584 = vld [vmem:[%s1 + $0x218] sm:$0xff]
      %v585 = vld [vmem:[%s1 + $0x220] sm:$0xff]
      %v586 = vld [vmem:[%s1 + $0x228] sm:$0xff]
      %v587 = vld [vmem:[%s1 + $0x230] sm:$0xff]
      %v588 = vld [vmem:[%s1 + $0x238] sm:$0xff]
      %v589 = vld [vmem:[%s2] sm:$0x1]
      %v591 = vlaneseq
      %v592 = vshrl.u32 %v591, 7
      %v593 = vsub.s32 0, %v592
      %v594 = vrot.slane %v589, %v593
      %v597 = vsel %vm225, %v349, 0
      %v600 = vsel %vm225, %v350, 0
      %v603 = vsel %vm225, %v351, 0
      %v606 = vsel %vm225, %v352, 0
      %v609 = vsel %vm225, %v353, 0
      %v612 = vsel %vm225, %v354, 0
      %v615 = vsel %vm225, %v355, 0
      %v618 = vsel %vm225, %v356, 0
      %620 = vmatprep.subr.mxu0 0.0
      %621 = vmatpush1.msra.mxu0 %v517
      %622 = vmatprep.subr.mxu0 0.0
      %623 = vmatpush1.msra.mxu0 %v518
      %624 = vmatprep.subr.mxu0 0.0
      %625 = vmatpush1.msra.mxu0 %v519
      %626 = vmatprep.subr.mxu0 0.0
      %627 = vmatpush1.msra.mxu0 %v520
      %628 = vmatprep.subr.mxu0 0.0
      %629 = vmatpush1.msra.mxu0 %v521
      %630 = vmatprep.subr.mxu0 0.0
      %631 = vmatpush1.msra.mxu0 %v522
      %632 = vmatprep.subr.mxu0 0.0
      %633 = vmatpush1.msra.mxu0 %v523
      %634 = vmatprep.subr.mxu0 0.0
      %635 = vmatpush1.msra.mxu0 %v524
      %636 = vmatprep.subr.mxu0 0.0
      %637 = vmatpush1.msra.mxu0 %v525
      %638 = vmatprep.subr.mxu0 0.0
      %639 = vmatpush1.msra.mxu0 %v526
      %640 = vmatprep.subr.mxu0 0.0
      %641 = vmatpush1.msra.mxu0 %v527
      %642 = vmatprep.subr.mxu0 0.0
      %643 = vmatpush1.msra.mxu0 %v528
      %644 = vmatprep.subr.mxu0 0.0
      %645 = vmatpush1.msra.mxu0 %v529
      %646 = vmatprep.subr.mxu0 0.0
      %647 = vmatpush1.msra.mxu0 %v530
      %648 = vmatprep.subr.mxu0 0.0
      %649 = vmatpush1.msra.mxu0 %v531
      %650 = vmatprep.subr.mxu0 0.0
      %651 = vmatpush1.msra.mxu0 %v532
      %652 = vmatprep.subr.mxu0 0.0
      %653 = vmatpush1.msra.mxu0 %v533
      %654 = vmatprep.subr.mxu0 0.0
      %655 = vmatpush1.msra.mxu0 %v534
      %656 = vmatprep.subr.mxu0 0.0
      %657 = vmatpush1.msra.mxu0 %v535
      %658 = vmatprep.subr.mxu0 0.0
      %659 = vmatpush1.msra.mxu0 %v536
      %660 = vmatprep.subr.mxu0 0.0
      %661 = vmatpush1.msra.mxu0 %v537
      %662 = vmatprep.subr.mxu0 0.0
      %663 = vmatpush1.msra.mxu0 %v538
      %664 = vmatprep.subr.mxu0 0.0
      %665 = vmatpush1.msra.mxu0 %v539
      %666 = vmatprep.subr.mxu0 0.0
      %667 = vmatpush1.msra.mxu0 %v540
      %668 = vmatprep.subr.mxu0 0.0
      %669 = vmatpush1.msra.mxu0 %v541
      %670 = vmatprep.subr.mxu0 0.0
      %671 = vmatpush1.msra.mxu0 %v542
      %672 = vmatprep.subr.mxu0 0.0
      %673 = vmatpush1.msra.mxu0 %v543
      %674 = vmatprep.subr.mxu0 0.0
      %675 = vmatpush1.msra.mxu0 %v544
      %676 = vmatprep.subr.mxu0 0.0
      %677 = vmatpush1.msra.mxu0 %v545
      %678 = vmatprep.subr.mxu0 0.0
      %679 = vmatpush1.msra.mxu0 %v546
      %680 = vmatprep.subr.mxu0 0.0
      %681 = vmatpush1.msra.mxu0 %v547
      %682 = vmatprep.subr.mxu0 0.0
      %683 = vmatpush1.msra.mxu0 %v548
      %684 = vmatprep.mubr.f32.mxu0 %v493
      %685 = vmatmul.mubr.f32.gmra.mrb[0].mxu0 %v485
      %v686 = vpop.f32.mrb[0].mxu0
      %v687 = vadd.f32 %v594, %v686
      %v688 = vpop.f32.mrb[0].mxu0
      %689 = vmatprep.mubr.f32.mxu0 %v494
      %690 = vmatmul.mubr.f32.gmra.mrb[0].mxu0 %v486
      %v691 = vpop.f32.mrb[0].mxu0
      %v692 = vadd.f32 %v594, %v691
      %v693 = vpop.f32.mrb[0].mxu0
      %694 = vmatprep.mubr.f32.mxu0 %v495
      %695 = vmatmul.mubr.f32.gmra.mrb[0].mxu0 %v487
      %v696 = vpop.f32.mrb[0].mxu0
      %v697 = vadd.f32 %v594, %v696
      %v698 = vpop.f32.mrb[0].mxu0
      %699 = vmatprep.mubr.f32.mxu0 %v496
      %700 = vmatmul.mubr.f32.gmra.mrb[0].mxu0 %v488
      %v701 = vpop.f32.mrb[0].mxu0
      %v702 = vadd.f32 %v594, %v701
      %v703 = vpop.f32.mrb[0].mxu0
      %704 = vmatprep.mubr.f32.mxu0 %v497
      %705 = vmatmul.mubr.f32.gmra.mrb[0].mxu0 %v489
      %v706 = vpop.f32.mrb[0].mxu0
      %v707 = vadd.f32 %v594, %v706
      %v708 = vpop.f32.mrb[0].mxu0
      %709 = vmatprep.mubr.f32.mxu0 %v498
      %710 = vmatmul.mubr.f32.gmra.mrb[0].mxu0 %v490
      %v711 = vpop.f32.mrb[0].mxu0
      %v712 = vadd.f32 %v594, %v711
      %v713 = vpop.f32.mrb[0].mxu0
      %714 = vmatprep.mubr.f32.mxu0 %v499
      %715 = vmatmul.mubr.f32.gmra.mrb[0].mxu0 %v491
      %v716 = vpop.f32.mrb[0].mxu0
      %v717 = vadd.f32 %v594, %v716
      %v718 = vpop.f32.mrb[0].mxu0
      %719 = vmatprep.mubr.f32.mxu0 %v500
      %720 = vmatmul.mubr.f32.gmra.mrb[0].mxu0 %v492
      %v721 = vpop.f32.mrb[0].mxu0
      %v722 = vadd.f32 %v594, %v721
      %v723 = vpop.f32.mrb[0].mxu0
      %724 = vdwg.mxu0
      %725 = vmatprep.subr.mxu0 0.0
      %726 = vmatpush1.msra.mxu0 %v549
      %727 = vmatprep.subr.mxu0 0.0
      %728 = vmatpush1.msra.mxu0 %v550
      %729 = vmatprep.subr.mxu0 0.0
      %730 = vmatpush1.msra.mxu0 %v551
      %731 = vmatprep.subr.mxu0 0.0
      %732 = vmatpush1.msra.mxu0 %v552
      %733 = vmatprep.subr.mxu0 0.0
      %734 = vmatpush1.msra.mxu0 %v553
      %735 = vmatprep.subr.mxu0 0.0
      %736 = vmatpush1.msra.mxu0 %v554
      %737 = vmatprep.subr.mxu0 0.0
      %738 = vmatpush1.msra.mxu0 %v555
      %739 = vmatprep.subr.mxu0 0.0
      %740 = vmatpush1.msra.mxu0 %v556
      %741 = vmatprep.subr.mxu0 0.0
      %742 = vmatpush1.msra.mxu0 %v557
      %743 = vmatprep.subr.mxu0 0.0
      %744 = vmatpush1.msra.mxu0 %v558
      %745 = vmatprep.subr.mxu0 0.0
      %746 = vmatpush1.msra.mxu0 %v559
      %747 = vmatprep.subr.mxu0 0.0
      %748 = vmatpush1.msra.mxu0 %v560
      %749 = vmatprep.subr.mxu0 0.0
      %750 = vmatpush1.msra.mxu0 %v561
      %751 = vmatprep.subr.mxu0 0.0
      %752 = vmatpush1.msra.mxu0 %v562
      %753 = vmatprep.subr.mxu0 0.0
      %754 = vmatpush1.msra.mxu0 %v563
      %755 = vmatprep.subr.mxu0 0.0
      %756 = vmatpush1.msra.mxu0 %v564
      %757 = vmatprep.subr.mxu0 0.0
      %758 = vmatpush1.msra.mxu0 %v565
      %759 = vmatprep.subr.mxu0 0.0
      %760 = vmatpush1.msra.mxu0 %v566
      %761 = vmatprep.subr.mxu0 0.0
      %762 = vmatpush1.msra.mxu0 %v567
      %763 = vmatprep.subr.mxu0 0.0
      %764 = vmatpush1.msra.mxu0 %v568
      %765 = vmatprep.subr.mxu0 0.0
      %766 = vmatpush1.msra.mxu0 %v569
      %767 = vmatprep.subr.mxu0 0.0
      %768 = vmatpush1.msra.mxu0 %v570
      %769 = vmatprep.subr.mxu0 0.0
      %770 = vmatpush1.msra.mxu0 %v571
      %771 = vmatprep.subr.mxu0 0.0
      %772 = vmatpush1.msra.mxu0 %v572
      %773 = vmatprep.subr.mxu0 0.0
      %774 = vmatpush1.msra.mxu0 %v573
      %775 = vmatprep.subr.mxu0 0.0
      %776 = vmatpush1.msra.mxu0 %v574
      %777 = vmatprep.subr.mxu0 0.0
      %778 = vmatpush1.msra.mxu0 %v575
      %779 = vmatprep.subr.mxu0 0.0
      %780 = vmatpush1.msra.mxu0 %v576
      %781 = vmatprep.subr.mxu0 0.0
      %782 = vmatpush1.msra.mxu0 %v577
      %783 = vmatprep.subr.mxu0 0.0
      %784 = vmatpush1.msra.mxu0 %v578
      %785 = vmatprep.subr.mxu0 0.0
      %786 = vmatpush1.msra.mxu0 %v579
      %787 = vmatprep.subr.mxu0 0.0
      %788 = vmatpush1.msra.mxu0 %v580
      %789 = vmatprep.mubr.f32.mxu0 %v509
      %790 = vmatmul.mubr.f32.gmra.mrb[0].mxu0 %v501
      %v791 = vpop.f32.mrb[0].mxu0
      %v792 = vadd.f32 %v687, %v791
      %v793 = vpop.f32.mrb[0].mxu0
      %794 = vmatprep.mubr.f32.mxu0 %v510
      %795 = vmatmul.mubr.f32.gmra.mrb[0].mxu0 %v502
      %v796 = vpop.f32.mrb[0].mxu0
      %v797 = vadd.f32 %v692, %v796
      %v798 = vpop.f32.mrb[0].mxu0
      %799 = vmatprep.mubr.f32.mxu0 %v511
      %800 = vmatmul.mubr.f32.gmra.mrb[0].mxu0 %v503
      %v801 = vpop.f32.mrb[0].mxu0
      %v802 = vadd.f32 %v697, %v801
      %v803 = vpop.f32.mrb[0].mxu0
      %804 = vmatprep.mubr.f32.mxu0 %v512
      %805 = vmatmul.mubr.f32.gmra.mrb[0].mxu0 %v504
      %v806 = vpop.f32.mrb[0].mxu0
      %v807 = vadd.f32 %v702, %v806
      %v808 = vpop.f32.mrb[0].mxu0
      %809 = vmatprep.mubr.f32.mxu0 %v513
      %810 = vmatmul.mubr.f32.gmra.mrb[0].mxu0 %v505
      %v811 = vpop.f32.mrb[0].mxu0
      %v812 = vadd.f32 %v707, %v811
      %v813 = vpop.f32.mrb[0].mxu0
      %814 = vmatprep.mubr.f32.mxu0 %v514
      %815 = vmatmul.mubr.f32.gmra.mrb[0].mxu0 %v506
      %v816 = vpop.f32.mrb[0].mxu0
      %v817 = vadd.f32 %v712, %v816
      %v818 = vpop.f32.mrb[0].mxu0
      %819 = vmatprep.mubr.f32.mxu0 %v515
      %820 = vmatmul.mubr.f32.gmra.mrb[0].mxu0 %v507
      %v821 = vpop.f32.mrb[0].mxu0
      %v822 = vadd.f32 %v717, %v821
      %v823 = vpop.f32.mrb[0].mxu0
      %824 = vmatprep.mubr.f32.mxu0 %v516
      %825 = vmatmul.mubr.f32.gmra.mrb[0].mxu0 %v508
      %v826 = vpop.f32.mrb[0].mxu0
      %v827 = vadd.f32 %v722, %v826
      %v828 = vpop.f32.mrb[0].mxu0
      %829 = vdwg.mxu0
      %830 = vmatprep.subr.mxu0 0.0
      %831 = vmatpush1.msra.mxu0 %v581
      %832 = vmatprep.subr.mxu0 0.0
      %833 = vmatpush1.msra.mxu0 %v582
      %834 = vmatprep.subr.mxu0 0.0
      %835 = vmatpush1.msra.mxu0 %v583
      %836 = vmatprep.subr.mxu0 0.0
      %837 = vmatpush1.msra.mxu0 %v584
      %838 = vmatprep.subr.mxu0 0.0
      %839 = vmatpush1.msra.mxu0 %v585
      %840 = vmatprep.subr.mxu0 0.0
      %841 = vmatpush1.msra.mxu0 %v586
      %842 = vmatprep.subr.mxu0 0.0
      %843 = vmatpush1.msra.mxu0 %v587
      %844 = vmatprep.subr.mxu0 0.0
      %845 = vmatpush1.msra.mxu0 %v588
      %846 = vmatprep.subr.mxu0 0.0
      %847 = vmatpush1.msra.mxu0 0.0
      %848 = vmatprep.subr.mxu0 0.0
      %849 = vmatpush1.msra.mxu0 0.0
      %850 = vmatprep.subr.mxu0 0.0
      %851 = vmatpush1.msra.mxu0 0.0
      %852 = vmatprep.subr.mxu0 0.0
      %853 = vmatpush1.msra.mxu0 0.0
      %854 = vmatprep.subr.mxu0 0.0
      %855 = vmatpush1.msra.mxu0 0.0
      %856 = vmatprep.subr.mxu0 0.0
      %857 = vmatpush1.msra.mxu0 0.0
      %858 = vmatprep.subr.mxu0 0.0
      %859 = vmatpush1.msra.mxu0 0.0
      %860 = vmatprep.subr.mxu0 0.0
      %861 = vmatpush1.msra.mxu0 0.0
      %862 = vmatprep.subr.mxu0 0.0
      %863 = vmatpush1.msra.mxu0 0.0
      %864 = vmatprep.subr.mxu0 0.0
      %865 = vmatpush1.msra.mxu0 0.0
      %866 = vmatprep.subr.mxu0 0.0
      %867 = vmatpush1.msra.mxu0 0.0
      %868 = vmatprep.subr.mxu0 0.0
      %869 = vmatpush1.msra.mxu0 0.0
      %870 = vmatprep.subr.mxu0 0.0
      %871 = vmatpush1.msra.mxu0 0.0
      %872 = vmatprep.subr.mxu0 0.0
      %873 = vmatpush1.msra.mxu0 0.0
      %874 = vmatprep.subr.mxu0 0.0
      %875 = vmatpush1.msra.mxu0 0.0
      %876 = vmatprep.subr.mxu0 0.0
      %877 = vmatpush1.msra.mxu0 0.0
      %878 = vmatprep.subr.mxu0 0.0
      %879 = vmatpush1.msra.mxu0 0.0
      %880 = vmatprep.subr.mxu0 0.0
      %881 = vmatpush1.msra.mxu0 0.0
      %882 = vmatprep.subr.mxu0 0.0
      %883 = vmatpush1.msra.mxu0 0.0
      %884 = vmatprep.subr.mxu0 0.0
      %885 = vmatpush1.msra.mxu0 0.0
      %886 = vmatprep.subr.mxu0 0.0
      %887 = vmatpush1.msra.mxu0 0.0
      %888 = vmatprep.subr.mxu0 0.0
      %889 = vmatpush1.msra.mxu0 0.0
      %890 = vmatprep.subr.mxu0 0.0
      %891 = vmatpush1.msra.mxu0 0.0
      %892 = vmatprep.subr.mxu0 0.0
      %893 = vmatpush1.msra.mxu0 0.0
      %894 = vmatprep.mubr.f32.mxu0 0.0
      %895 = vmatmul.mubr.f32.gmra.mrb[0].mxu0 %v597
      %v896 = vpop.f32.mrb[0].mxu0
      %v897 = vadd.f32 %v792, %v896
      %v898 = vpop.f32.mrb[0].mxu0
      %899 = vmatprep.mubr.f32.mxu0 0.0
      %900 = vmatmul.mubr.f32.gmra.mrb[0].mxu0 %v600
      %v901 = vpop.f32.mrb[0].mxu0
      %v902 = vadd.f32 %v797, %v901
      %v903 = vpop.f32.mrb[0].mxu0
      %904 = vmatprep.mubr.f32.mxu0 0.0
      %905 = vmatmul.mubr.f32.gmra.mrb[0].mxu0 %v603
      %v906 = vpop.f32.mrb[0].mxu0
      %v907 = vadd.f32 %v802, %v906
      %v908 = vpop.f32.mrb[0].mxu0
      %909 = vmatprep.mubr.f32.mxu0 0.0
      %910 = vmatmul.mubr.f32.gmra.mrb[0].mxu0 %v606
      %v911 = vpop.f32.mrb[0].mxu0
      %v912 = vadd.f32 %v807, %v911
      %v913 = vpop.f32.mrb[0].mxu0
      %914 = vmatprep.mubr.f32.mxu0 0.0
      %915 = vmatmul.mubr.f32.gmra.mrb[0].mxu0 %v609
      %v916 = vpop.f32.mrb[0].mxu0
      %v917 = vadd.f32 %v812, %v916
      %v918 = vpop.f32.mrb[0].mxu0
      %919 = vmatprep.mubr.f32.mxu0 0.0
      %920 = vmatmul.mubr.f32.gmra.mrb[0].mxu0 %v612
      %v921 = vpop.f32.mrb[0].mxu0
      %v922 = vadd.f32 %v817, %v921
      %v923 = vpop.f32.mrb[0].mxu0
      %924 = vmatprep.mubr.f32.mxu0 0.0
      %925 = vmatmul.mubr.f32.gmra.mrb[0].mxu0 %v615
      %v926 = vpop.f32.mrb[0].mxu0
      %v927 = vadd.f32 %v822, %v926
      %v928 = vpop.f32.mrb[0].mxu0
      %929 = vmatprep.mubr.f32.mxu0 0.0
      %930 = vmatmul.mubr.f32.gmra.mrb[0].mxu0 %v618
      %v931 = vpop.f32.mrb[0].mxu0
      %v932 = vadd.f32 %v827, %v931
      %v933 = vpop.f32.mrb[0].mxu0
      %934 = vdwg.mxu0
      %v935 = vmax.f32 %v897, 0.0
      %v936 = vmax.f32 %v902, 0.0
      %v937 = vmax.f32 %v907, 0.0
      %v938 = vmax.f32 %v912, 0.0
      %v939 = vmax.f32 %v917, 0.0
      %v940 = vmax.f32 %v922, 0.0
      %v941 = vmax.f32 %v927, 0.0
      %v942 = vmax.f32 %v932, 0.0
      %s943 = scalar_lea.vmem [#allocation3], 16
      %944 = vst.msk [vmem:[%s943 + $0x1] sm:$0xff] %vm225, %v935
      %945 = vst.msk [vmem:[%s943 + $0x11] sm:$0xff] %vm225, %v936
      %946 = vst.msk [vmem:[%s943 + $0x21] sm:$0xff] %vm225, %v937
      %947 = vst.msk [vmem:[%s943 + $0x31] sm:$0xff] %vm225, %v938
      %948 = vst.msk [vmem:[%s943 + $0x41] sm:$0xff] %vm225, %v939
      %949 = vst.msk [vmem:[%s943 + $0x51] sm:$0xff] %vm225, %v940
      %950 = vst.msk [vmem:[%s943 + $0x61] sm:$0xff] %vm225, %v941
      %951 = vst.msk [vmem:[%s943 + $0x71] sm:$0xff] %vm225, %v942
      %v952 = vld [vmem:[#allocation3] sm:$0xff]
      %v953 = vld [vmem:[#allocation3 + $0x10] sm:$0xff]
      %v954 = vld [vmem:[#allocation3 + $0x20] sm:$0xff]
      %v955 = vld [vmem:[#allocation3 + $0x30] sm:$0xff]
      %v956 = vld [vmem:[#allocation3 + $0x40] sm:$0xff]
      %v957 = vld [vmem:[#allocation3 + $0x50] sm:$0xff]
      %v958 = vld [vmem:[#allocation3 + $0x60] sm:$0xff]
      %v959 = vld [vmem:[#allocation3 + $0x70] sm:$0xff]
      %v960 = vld [vmem:[#allocation3 + $0x1] sm:$0xff]
      %v961 = vld [vmem:[#allocation3 + $0x11] sm:$0xff]
      %v962 = vld [vmem:[#allocation3 + $0x21] sm:$0xff]
      %v963 = vld [vmem:[#allocation3 + $0x31] sm:$0xff]
      %v964 = vld [vmem:[#allocation3 + $0x41] sm:$0xff]
      %v965 = vld [vmem:[#allocation3 + $0x51] sm:$0xff]
      %v966 = vld [vmem:[#allocation3 + $0x61] sm:$0xff]
      %v967 = vld [vmem:[#allocation3 + $0x71] sm:$0xff]
      %v968 = vld [vmem:[#allocation3 + $0x2] sm:$0xff]
      %v969 = vld [vmem:[#allocation3 + $0x12] sm:$0xff]
      %v970 = vld [vmem:[#allocation3 + $0x22] sm:$0xff]
      %v971 = vld [vmem:[#allocation3 + $0x32] sm:$0xff]
      %v972 = vld [vmem:[#allocation3 + $0x42] sm:$0xff]
      %v973 = vld [vmem:[#allocation3 + $0x52] sm:$0xff]
      %v974 = vld [vmem:[#allocation3 + $0x62] sm:$0xff]
      %v975 = vld [vmem:[#allocation3 + $0x72] sm:$0xff]
      %v976 = vld [vmem:[%s943] sm:$0xff]
      %v977 = vld [vmem:[%s943 + $0x10] sm:$0xff]
      %v978 = vld [vmem:[%s943 + $0x20] sm:$0xff]
      %v979 = vld [vmem:[%s943 + $0x30] sm:$0xff]
      %v980 = vld [vmem:[%s943 + $0x40] sm:$0xff]
      %v981 = vld [vmem:[%s943 + $0x50] sm:$0xff]
      %v982 = vld [vmem:[%s943 + $0x60] sm:$0xff]
      %v983 = vld [vmem:[%s943 + $0x70] sm:$0xff]
      %v984 = vld [vmem:[%s943 + $0x1] sm:$0xff]
      %v985 = vld [vmem:[%s943 + $0x11] sm:$0xff]
      %v986 = vld [vmem:[%s943 + $0x21] sm:$0xff]
      %v987 = vld [vmem:[%s943 + $0x31] sm:$0xff]
      %v988 = vld [vmem:[%s943 + $0x41] sm:$0xff]
      %v989 = vld [vmem:[%s943 + $0x51] sm:$0xff]
      %v990 = vld [vmem:[%s943 + $0x61] sm:$0xff]
      %v991 = vld [vmem:[%s943 + $0x71] sm:$0xff]
      %v992 = vld [vmem:[%s943 + $0x2] sm:$0xff]
      %v993 = vld [vmem:[%s943 + $0x12] sm:$0xff]
      %v994 = vld [vmem:[%s943 + $0x22] sm:$0xff]
      %v995 = vld [vmem:[%s943 + $0x32] sm:$0xff]
      %v996 = vld [vmem:[%s943 + $0x42] sm:$0xff]
      %v997 = vld [vmem:[%s943 + $0x52] sm:$0xff]
      %v998 = vld [vmem:[%s943 + $0x62] sm:$0xff]
      %v999 = vld [vmem:[%s943 + $0x72] sm:$0xff]
      %s1000 = scalar_lea.vmem [#allocation3], 32
      %v1001 = vld [vmem:[%s1000] sm:$0xff]
      %v1002 = vld [vmem:[%s1000 + $0x10] sm:$0xff]
      %v1003 = vld [vmem:[%s1000 + $0x20] sm:$0xff]
      %v1004 = vld [vmem:[%s1000 + $0x30] sm:$0xff]
      %v1005 = vld [vmem:[%s1000 + $0x40] sm:$0xff]
      %v1006 = vld [vmem:[%s1000 + $0x50] sm:$0xff]
      %v1007 = vld [vmem:[%s1000 + $0x60] sm:$0xff]
      %v1008 = vld [vmem:[%s1000 + $0x70] sm:$0xff]
      %v1009 = vld [vmem:[%s1000 + $0x1] sm:$0xff]
      %v1010 = vld [vmem:[%s1000 + $0x11] sm:$0xff]
      %v1011 = vld [vmem:[%s1000 + $0x21] sm:$0xff]
      %v1012 = vld [vmem:[%s1000 + $0x31] sm:$0xff]
      %v1013 = vld [vmem:[%s1000 + $0x41] sm:$0xff]
      %v1014 = vld [vmem:[%s1000 + $0x51] sm:$0xff]
      %v1015 = vld [vmem:[%s1000 + $0x61] sm:$0xff]
      %v1016 = vld [vmem:[%s1000 + $0x71] sm:$0xff]
      %v1017 = vld [vmem:[%s1000 + $0x2] sm:$0xff]
      %v1018 = vld [vmem:[%s1000 + $0x12] sm:$0xff]
      %v1019 = vld [vmem:[%s1000 + $0x22] sm:$0xff]
      %v1020 = vld [vmem:[%s1000 + $0x32] sm:$0xff]
      %v1021 = vld [vmem:[%s1000 + $0x42] sm:$0xff]
      %v1022 = vld [vmem:[%s1000 + $0x52] sm:$0xff]
      %v1023 = vld [vmem:[%s1000 + $0x62] sm:$0xff]
      %v1024 = vld [vmem:[%s1000 + $0x72] sm:$0xff]
      %1033 = vrot.lane.b32.xlu0 %v960, 64
      %v1034 = vpop.permute.xlu0 %1033
      %1035 = vrot.lane.b32.xlu0 %v961, 64
      %v1036 = vpop.permute.xlu0 %1035
      %1037 = vrot.lane.b32.xlu0 %v962, 64
      %v1038 = vpop.permute.xlu0 %1037
      %1039 = vrot.lane.b32.xlu0 %v963, 64
      %v1040 = vpop.permute.xlu0 %1039
      %1041 = vrot.lane.b32.xlu0 %v964, 64
      %v1042 = vpop.permute.xlu0 %1041
      %1043 = vrot.lane.b32.xlu0 %v965, 64
      %v1044 = vpop.permute.xlu0 %1043
      %1045 = vrot.lane.b32.xlu0 %v966, 64
      %v1046 = vpop.permute.xlu0 %1045
      %1047 = vrot.lane.b32.xlu0 %v967, 64
      %v1048 = vpop.permute.xlu0 %1047
      %1065 = vrot.lane.b32.xlu0 %v976, 64
      %v1066 = vpop.permute.xlu0 %1065
      %1067 = vrot.lane.b32.xlu0 %v977, 64
      %v1068 = vpop.permute.xlu0 %1067
      %1069 = vrot.lane.b32.xlu0 %v978, 64
      %v1070 = vpop.permute.xlu0 %1069
      %1071 = vrot.lane.b32.xlu0 %v979, 64
      %v1072 = vpop.permute.xlu0 %1071
      %1073 = vrot.lane.b32.xlu0 %v980, 64
      %v1074 = vpop.permute.xlu0 %1073
      %1075 = vrot.lane.b32.xlu0 %v981, 64
      %v1076 = vpop.permute.xlu0 %1075
      %1077 = vrot.lane.b32.xlu0 %v982, 64
      %v1078 = vpop.permute.xlu0 %1077
      %1079 = vrot.lane.b32.xlu0 %v983, 64
      %v1080 = vpop.permute.xlu0 %1079
      %1097 = vrot.lane.b32.xlu0 %v992, 64
      %v1098 = vpop.permute.xlu0 %1097
      %1099 = vrot.lane.b32.xlu0 %v993, 64
      %v1100 = vpop.permute.xlu0 %1099
      %1101 = vrot.lane.b32.xlu0 %v994, 64
      %v1102 = vpop.permute.xlu0 %1101
      %1103 = vrot.lane.b32.xlu0 %v995, 64
      %v1104 = vpop.permute.xlu0 %1103
      %1105 = vrot.lane.b32.xlu0 %v996, 64
      %v1106 = vpop.permute.xlu0 %1105
      %1107 = vrot.lane.b32.xlu0 %v997, 64
      %v1108 = vpop.permute.xlu0 %1107
      %1109 = vrot.lane.b32.xlu0 %v998, 64
      %v1110 = vpop.permute.xlu0 %1109
      %1111 = vrot.lane.b32.xlu0 %v999, 64
      %v1112 = vpop.permute.xlu0 %1111
      %1129 = vrot.lane.b32.xlu0 %v1009, 64
      %v1130 = vpop.permute.xlu0 %1129
      %1131 = vrot.lane.b32.xlu0 %v1010, 64
      %v1132 = vpop.permute.xlu0 %1131
      %1133 = vrot.lane.b32.xlu0 %v1011, 64
      %v1134 = vpop.permute.xlu0 %1133
      %1135 = vrot.lane.b32.xlu0 %v1012, 64
      %v1136 = vpop.permute.xlu0 %1135
      %1137 = vrot.lane.b32.xlu0 %v1013, 64
      %v1138 = vpop.permute.xlu0 %1137
      %1139 = vrot.lane.b32.xlu0 %v1014, 64
      %v1140 = vpop.permute.xlu0 %1139
      %1141 = vrot.lane.b32.xlu0 %v1015, 64
      %v1142 = vpop.permute.xlu0 %1141
      %1143 = vrot.lane.b32.xlu0 %v1016, 64
      %v1144 = vpop.permute.xlu0 %1143
      %v1153 = vsel %vm225, %v952, %v1034
      %v1154 = vsel %vm225, %v953, %v1036
      %v1155 = vsel %vm225, %v954, %v1038
      %v1156 = vsel %vm225, %v955, %v1040
      %v1157 = vsel %vm225, %v956, %v1042
      %v1158 = vsel %vm225, %v957, %v1044
      %v1159 = vsel %vm225, %v958, %v1046
      %v1160 = vsel %vm225, %v959, %v1048
      %v1161 = vsel %vm225, %v968, %v1066
      %v1162 = vsel %vm225, %v969, %v1068
      %v1163 = vsel %vm225, %v970, %v1070
      %v1164 = vsel %vm225, %v971, %v1072
      %v1165 = vsel %vm225, %v972, %v1074
      %v1166 = vsel %vm225, %v973, %v1076
      %v1167 = vsel %vm225, %v974, %v1078
      %v1168 = vsel %vm225, %v975, %v1080
      %v1169 = vsel %vm225, %v984, %v1098
      %v1170 = vsel %vm225, %v985, %v1100
      %v1171 = vsel %vm225, %v986, %v1102
      %v1172 = vsel %vm225, %v987, %v1104
      %v1173 = vsel %vm225, %v988, %v1106
      %v1174 = vsel %vm225, %v989, %v1108
      %v1175 = vsel %vm225, %v990, %v1110
      %v1176 = vsel %vm225, %v991, %v1112
      %v1177 = vsel %vm225, %v1001, %v1130
      %v1178 = vsel %vm225, %v1002, %v1132
      %v1179 = vsel %vm225, %v1003, %v1134
      %v1180 = vsel %vm225, %v1004, %v1136
      %v1181 = vsel %vm225, %v1005, %v1138
      %v1182 = vsel %vm225, %v1006, %v1140
      %v1183 = vsel %vm225, %v1007, %v1142
      %v1184 = vsel %vm225, %v1008, %v1144
      %v1185 = vld [vmem:[%s3] sm:$0xff]
      %v1186 = vld [vmem:[%s3 + $0x8] sm:$0xff]
      %v1187 = vld [vmem:[%s3 + $0x10] sm:$0xff]
      %v1188 = vld [vmem:[%s3 + $0x18] sm:$0xff]
      %v1189 = vld [vmem:[%s3 + $0x20] sm:$0xff]
      %v1190 = vld [vmem:[%s3 + $0x28] sm:$0xff]
      %v1191 = vld [vmem:[%s3 + $0x30] sm:$0xff]
      %v1192 = vld [vmem:[%s3 + $0x38] sm:$0xff]
      %v1193 = vld [vmem:[%s3 + $0x40] sm:$0xff]
      %v1194 = vld [vmem:[%s3 + $0x48] sm:$0xff]
      %v1195 = vld [vmem:[%s3 + $0x50] sm:$0xff]
      %v1196 = vld [vmem:[%s3 + $0x58] sm:$0xff]
      %v1197 = vld [vmem:[%s3 + $0x60] sm:$0xff]
      %v1198 = vld [vmem:[%s3 + $0x68] sm:$0xff]
      %v1199 = vld [vmem:[%s3 + $0x70] sm:$0xff]
      %v1200 = vld [vmem:[%s3 + $0x78] sm:$0xff]
      %v1201 = vld [vmem:[%s3 + $0x80] sm:$0xff]
      %v1202 = vld [vmem:[%s3 + $0x88] sm:$0xff]
      %v1203 = vld [vmem:[%s3 + $0x90] sm:$0xff]
      %v1204 = vld [vmem:[%s3 + $0x98] sm:$0xff]
      %v1205 = vld [vmem:[%s3 + $0xa0] sm:$0xff]
      %v1206 = vld [vmem:[%s3 + $0xa8] sm:$0xff]
      %v1207 = vld [vmem:[%s3 + $0xb0] sm:$0xff]
      %v1208 = vld [vmem:[%s3 + $0xb8] sm:$0xff]
      %v1209 = vld [vmem:[%s3 + $0xc0] sm:$0xff]
      %v1210 = vld [vmem:[%s3 + $0xc8] sm:$0xff]
      %v1211 = vld [vmem:[%s3 + $0xd0] sm:$0xff]
      %v1212 = vld [vmem:[%s3 + $0xd8] sm:$0xff]
      %v1213 = vld [vmem:[%s3 + $0xe0] sm:$0xff]
      %v1214 = vld [vmem:[%s3 + $0xe8] sm:$0xff]
      %v1215 = vld [vmem:[%s3 + $0xf0] sm:$0xff]
      %v1216 = vld [vmem:[%s3 + $0xf8] sm:$0xff]
      %v1217 = vld [vmem:[%s3 + $0x100] sm:$0xff]
      %v1218 = vld [vmem:[%s3 + $0x108] sm:$0xff]
      %v1219 = vld [vmem:[%s3 + $0x110] sm:$0xff]
      %v1220 = vld [vmem:[%s3 + $0x118] sm:$0xff]
      %v1221 = vld [vmem:[%s3 + $0x120] sm:$0xff]
      %v1222 = vld [vmem:[%s3 + $0x128] sm:$0xff]
      %v1223 = vld [vmem:[%s3 + $0x130] sm:$0xff]
      %v1224 = vld [vmem:[%s3 + $0x138] sm:$0xff]
      %v1225 = vld [vmem:[%s3 + $0x140] sm:$0xff]
      %v1226 = vld [vmem:[%s3 + $0x148] sm:$0xff]
      %v1227 = vld [vmem:[%s3 + $0x150] sm:$0xff]
      %v1228 = vld [vmem:[%s3 + $0x158] sm:$0xff]
      %v1229 = vld [vmem:[%s3 + $0x160] sm:$0xff]
      %v1230 = vld [vmem:[%s3 + $0x168] sm:$0xff]
      %v1231 = vld [vmem:[%s3 + $0x170] sm:$0xff]
      %v1232 = vld [vmem:[%s3 + $0x178] sm:$0xff]
      %v1233 = vld [vmem:[%s3 + $0x180] sm:$0xff]
      %v1234 = vld [vmem:[%s3 + $0x188] sm:$0xff]
      %v1235 = vld [vmem:[%s3 + $0x190] sm:$0xff]
      %v1236 = vld [vmem:[%s3 + $0x198] sm:$0xff]
      %v1237 = vld [vmem:[%s3 + $0x1a0] sm:$0xff]
      %v1238 = vld [vmem:[%s3 + $0x1a8] sm:$0xff]
      %v1239 = vld [vmem:[%s3 + $0x1b0] sm:$0xff]
      %v1240 = vld [vmem:[%s3 + $0x1b8] sm:$0xff]
      %v1241 = vld [vmem:[%s3 + $0x1c0] sm:$0xff]
      %v1242 = vld [vmem:[%s3 + $0x1c8] sm:$0xff]
      %v1243 = vld [vmem:[%s3 + $0x1d0] sm:$0xff]
      %v1244 = vld [vmem:[%s3 + $0x1d8] sm:$0xff]
      %v1245 = vld [vmem:[%s3 + $0x1e0] sm:$0xff]
      %v1246 = vld [vmem:[%s3 + $0x1e8] sm:$0xff]
      %v1247 = vld [vmem:[%s3 + $0x1f0] sm:$0xff]
      %v1248 = vld [vmem:[%s3 + $0x1f8] sm:$0xff]
      %v1249 = vld [vmem:[%s3 + $0x200] sm:$0xff]
      %v1250 = vld [vmem:[%s3 + $0x208] sm:$0xff]
      %v1251 = vld [vmem:[%s3 + $0x210] sm:$0xff]
      %v1252 = vld [vmem:[%s3 + $0x218] sm:$0xff]
      %v1253 = vld [vmem:[%s3 + $0x220] sm:$0xff]
      %v1254 = vld [vmem:[%s3 + $0x228] sm:$0xff]
      %v1255 = vld [vmem:[%s3 + $0x230] sm:$0xff]
      %v1256 = vld [vmem:[%s3 + $0x238] sm:$0xff]
      %v1257 = vld [vmem:[%s4] sm:$0x1]
      %v1259 = vlaneseq
      %v1260 = vshrl.u32 %v1259, 7
      %v1261 = vsub.s32 0, %v1260
      %v1262 = vrot.slane %v1257, %v1261
      %v1265 = vsel %vm225, %v1017, 0
      %v1268 = vsel %vm225, %v1018, 0
      %v1271 = vsel %vm225, %v1019, 0
      %v1274 = vsel %vm225, %v1020, 0
      %v1277 = vsel %vm225, %v1021, 0
      %v1280 = vsel %vm225, %v1022, 0
      %v1283 = vsel %vm225, %v1023, 0
      %v1286 = vsel %vm225, %v1024, 0
      %1288 = vmatprep.subr.mxu0 0.0
      %1289 = vmatpush1.msra.mxu0 %v1185
      %1290 = vmatprep.subr.mxu0 0.0
      %1291 = vmatpush1.msra.mxu0 %v1186
      %1292 = vmatprep.subr.mxu0 0.0
      %1293 = vmatpush1.msra.mxu0 %v1187
      %1294 = vmatprep.subr.mxu0 0.0
      %1295 = vmatpush1.msra.mxu0 %v1188
      %1296 = vmatprep.subr.mxu0 0.0
      %1297 = vmatpush1.msra.mxu0 %v1189
      %1298 = vmatprep.subr.mxu0 0.0
      %1299 = vmatpush1.msra.mxu0 %v1190
      %1300 = vmatprep.subr.mxu0 0.0
      %1301 = vmatpush1.msra.mxu0 %v1191
      %1302 = vmatprep.subr.mxu0 0.0
      %1303 = vmatpush1.msra.mxu0 %v1192
      %1304 = vmatprep.subr.mxu0 0.0
      %1305 = vmatpush1.msra.mxu0 %v1193
      %1306 = vmatprep.subr.mxu0 0.0
      %1307 = vmatpush1.msra.mxu0 %v1194
      %1308 = vmatprep.subr.mxu0 0.0
      %1309 = vmatpush1.msra.mxu0 %v1195
      %1310 = vmatprep.subr.mxu0 0.0
      %1311 = vmatpush1.msra.mxu0 %v1196
      %1312 = vmatprep.subr.mxu0 0.0
      %1313 = vmatpush1.msra.mxu0 %v1197
      %1314 = vmatprep.subr.mxu0 0.0
      %1315 = vmatpush1.msra.mxu0 %v1198
      %1316 = vmatprep.subr.mxu0 0.0
      %1317 = vmatpush1.msra.mxu0 %v1199
      %1318 = vmatprep.subr.mxu0 0.0
      %1319 = vmatpush1.msra.mxu0 %v1200
      %1320 = vmatprep.subr.mxu0 0.0
      %1321 = vmatpush1.msra.mxu0 %v1201
      %1322 = vmatprep.subr.mxu0 0.0
      %1323 = vmatpush1.msra.mxu0 %v1202
      %1324 = vmatprep.subr.mxu0 0.0
      %1325 = vmatpush1.msra.mxu0 %v1203
      %1326 = vmatprep.subr.mxu0 0.0
      %1327 = vmatpush1.msra.mxu0 %v1204
      %1328 = vmatprep.subr.mxu0 0.0
      %1329 = vmatpush1.msra.mxu0 %v1205
      %1330 = vmatprep.subr.mxu0 0.0
      %1331 = vmatpush1.msra.mxu0 %v1206
      %1332 = vmatprep.subr.mxu0 0.0
      %1333 = vmatpush1.msra.mxu0 %v1207
      %1334 = vmatprep.subr.mxu0 0.0
      %1335 = vmatpush1.msra.mxu0 %v1208
      %1336 = vmatprep.subr.mxu0 0.0
      %1337 = vmatpush1.msra.mxu0 %v1209
      %1338 = vmatprep.subr.mxu0 0.0
      %1339 = vmatpush1.msra.mxu0 %v1210
      %1340 = vmatprep.subr.mxu0 0.0
      %1341 = vmatpush1.msra.mxu0 %v1211
      %1342 = vmatprep.subr.mxu0 0.0
      %1343 = vmatpush1.msra.mxu0 %v1212
      %1344 = vmatprep.subr.mxu0 0.0
      %1345 = vmatpush1.msra.mxu0 %v1213
      %1346 = vmatprep.subr.mxu0 0.0
      %1347 = vmatpush1.msra.mxu0 %v1214
      %1348 = vmatprep.subr.mxu0 0.0
      %1349 = vmatpush1.msra.mxu0 %v1215
      %1350 = vmatprep.subr.mxu0 0.0
      %1351 = vmatpush1.msra.mxu0 %v1216
      %1352 = vmatprep.mubr.f32.mxu0 %v1161
      %1353 = vmatmul.mubr.f32.gmra.mrb[0].mxu0 %v1153
      %v1354 = vpop.f32.mrb[0].mxu0
      %v1355 = vadd.f32 %v1262, %v1354
      %v1356 = vpop.f32.mrb[0].mxu0
      %1357 = vmatprep.mubr.f32.mxu0 %v1162
      %1358 = vmatmul.mubr.f32.gmra.mrb[0].mxu0 %v1154
      %v1359 = vpop.f32.mrb[0].mxu0
      %v1360 = vadd.f32 %v1262, %v1359
      %v1361 = vpop.f32.mrb[0].mxu0
      %1362 = vmatprep.mubr.f32.mxu0 %v1163
      %1363 = vmatmul.mubr.f32.gmra.mrb[0].mxu0 %v1155
      %v1364 = vpop.f32.mrb[0].mxu0
      %v1365 = vadd.f32 %v1262, %v1364
      %v1366 = vpop.f32.mrb[0].mxu0
      %1367 = vmatprep.mubr.f32.mxu0 %v1164
      %1368 = vmatmul.mubr.f32.gmra.mrb[0].mxu0 %v1156
      %v1369 = vpop.f32.mrb[0].mxu0
      %v1370 = vadd.f32 %v1262, %v1369
      %v1371 = vpop.f32.mrb[0].mxu0
      %1372 = vmatprep.mubr.f32.mxu0 %v1165
      %1373 = vmatmul.mubr.f32.gmra.mrb[0].mxu0 %v1157
      %v1374 = vpop.f32.mrb[0].mxu0
      %v1375 = vadd.f32 %v1262, %v1374
      %v1376 = vpop.f32.mrb[0].mxu0
      %1377 = vmatprep.mubr.f32.mxu0 %v1166
      %1378 = vmatmul.mubr.f32.gmra.mrb[0].mxu0 %v1158
      %v1379 = vpop.f32.mrb[0].mxu0
      %v1380 = vadd.f32 %v1262, %v1379
      %v1381 = vpop.f32.mrb[0].mxu0
      %1382 = vmatprep.mubr.f32.mxu0 %v1167
      %1383 = vmatmul.mubr.f32.gmra.mrb[0].mxu0 %v1159
      %v1384 = vpop.f32.mrb[0].mxu0
      %v1385 = vadd.f32 %v1262, %v1384
      %v1386 = vpop.f32.mrb[0].mxu0
      %1387 = vmatprep.mubr.f32.mxu0 %v1168
      %1388 = vmatmul.mubr.f32.gmra.mrb[0].mxu0 %v1160
      %v1389 = vpop.f32.mrb[0].mxu0
      %v1390 = vadd.f32 %v1262, %v1389
      %v1391 = vpop.f32.mrb[0].mxu0
      %1392 = vdwg.mxu0
      %1393 = vmatprep.subr.mxu0 0.0
      %1394 = vmatpush1.msra.mxu0 %v1217
      %1395 = vmatprep.subr.mxu0 0.0
      %1396 = vmatpush1.msra.mxu0 %v1218
      %1397 = vmatprep.subr.mxu0 0.0
      %1398 = vmatpush1.msra.mxu0 %v1219
      %1399 = vmatprep.subr.mxu0 0.0
      %1400 = vmatpush1.msra.mxu0 %v1220
      %1401 = vmatprep.subr.mxu0 0.0
      %1402 = vmatpush1.msra.mxu0 %v1221
      %1403 = vmatprep.subr.mxu0 0.0
      %1404 = vmatpush1.msra.mxu0 %v1222
      %1405 = vmatprep.subr.mxu0 0.0
      %1406 = vmatpush1.msra.mxu0 %v1223
      %1407 = vmatprep.subr.mxu0 0.0
      %1408 = vmatpush1.msra.mxu0 %v1224
      %1409 = vmatprep.subr.mxu0 0.0
      %1410 = vmatpush1.msra.mxu0 %v1225
      %1411 = vmatprep.subr.mxu0 0.0
      %1412 = vmatpush1.msra.mxu0 %v1226
      %1413 = vmatprep.subr.mxu0 0.0
      %1414 = vmatpush1.msra.mxu0 %v1227
      %1415 = vmatprep.subr.mxu0 0.0
      %1416 = vmatpush1.msra.mxu0 %v1228
      %1417 = vmatprep.subr.mxu0 0.0
      %1418 = vmatpush1.msra.mxu0 %v1229
      %1419 = vmatprep.subr.mxu0 0.0
      %1420 = vmatpush1.msra.mxu0 %v1230
      %1421 = vmatprep.subr.mxu0 0.0
      %1422 = vmatpush1.msra.mxu0 %v1231
      %1423 = vmatprep.subr.mxu0 0.0
      %1424 = vmatpush1.msra.mxu0 %v1232
      %1425 = vmatprep.subr.mxu0 0.0
      %1426 = vmatpush1.msra.mxu0 %v1233
      %1427 = vmatprep.subr.mxu0 0.0
      %1428 = vmatpush1.msra.mxu0 %v1234
      %1429 = vmatprep.subr.mxu0 0.0
      %1430 = vmatpush1.msra.mxu0 %v1235
      %1431 = vmatprep.subr.mxu0 0.0
      %1432 = vmatpush1.msra.mxu0 %v1236
      %1433 = vmatprep.subr.mxu0 0.0
      %1434 = vmatpush1.msra.mxu0 %v1237
      %1435 = vmatprep.subr.mxu0 0.0
      %1436 = vmatpush1.msra.mxu0 %v1238
      %1437 = vmatprep.subr.mxu0 0.0
      %1438 = vmatpush1.msra.mxu0 %v1239
      %1439 = vmatprep.subr.mxu0 0.0
      %1440 = vmatpush1.msra.mxu0 %v1240
      %1441 = vmatprep.subr.mxu0 0.0
      %1442 = vmatpush1.msra.mxu0 %v1241
      %1443 = vmatprep.subr.mxu0 0.0
      %1444 = vmatpush1.msra.mxu0 %v1242
      %1445 = vmatprep.subr.mxu0 0.0
      %1446 = vmatpush1.msra.mxu0 %v1243
      %1447 = vmatprep.subr.mxu0 0.0
      %1448 = vmatpush1.msra.mxu0 %v1244
      %1449 = vmatprep.subr.mxu0 0.0
      %1450 = vmatpush1.msra.mxu0 %v1245
      %1451 = vmatprep.subr.mxu0 0.0
      %1452 = vmatpush1.msra.mxu0 %v1246
      %1453 = vmatprep.subr.mxu0 0.0
      %1454 = vmatpush1.msra.mxu0 %v1247
      %1455 = vmatprep.subr.mxu0 0.0
      %1456 = vmatpush1.msra.mxu0 %v1248
      %1457 = vmatprep.mubr.f32.mxu0 %v1177
      %1458 = vmatmul.mubr.f32.gmra.mrb[0].mxu0 %v1169
      %v1459 = vpop.f32.mrb[0].mxu0
      %v1460 = vadd.f32 %v1355, %v1459
      %v1461 = vpop.f32.mrb[0].mxu0
      %1462 = vmatprep.mubr.f32.mxu0 %v1178
      %1463 = vmatmul.mubr.f32.gmra.mrb[0].mxu0 %v1170
      %v1464 = vpop.f32.mrb[0].mxu0
      %v1465 = vadd.f32 %v1360, %v1464
      %v1466 = vpop.f32.mrb[0].mxu0
      %1467 = vmatprep.mubr.f32.mxu0 %v1179
      %1468 = vmatmul.mubr.f32.gmra.mrb[0].mxu0 %v1171
      %v1469 = vpop.f32.mrb[0].mxu0
      %v1470 = vadd.f32 %v1365, %v1469
      %v1471 = vpop.f32.mrb[0].mxu0
      %1472 = vmatprep.mubr.f32.mxu0 %v1180
      %1473 = vmatmul.mubr.f32.gmra.mrb[0].mxu0 %v1172
      %v1474 = vpop.f32.mrb[0].mxu0
      %v1475 = vadd.f32 %v1370, %v1474
      %v1476 = vpop.f32.mrb[0].mxu0
      %1477 = vmatprep.mubr.f32.mxu0 %v1181
      %1478 = vmatmul.mubr.f32.gmra.mrb[0].mxu0 %v1173
      %v1479 = vpop.f32.mrb[0].mxu0
      %v1480 = vadd.f32 %v1375, %v1479
      %v1481 = vpop.f32.mrb[0].mxu0
      %1482 = vmatprep.mubr.f32.mxu0 %v1182
      %1483 = vmatmul.mubr.f32.gmra.mrb[0].mxu0 %v1174
      %v1484 = vpop.f32.mrb[0].mxu0
      %v1485 = vadd.f32 %v1380, %v1484
      %v1486 = vpop.f32.mrb[0].mxu0
      %1487 = vmatprep.mubr.f32.mxu0 %v1183
      %1488 = vmatmul.mubr.f32.gmra.mrb[0].mxu0 %v1175
      %v1489 = vpop.f32.mrb[0].mxu0
      %v1490 = vadd.f32 %v1385, %v1489
      %v1491 = vpop.f32.mrb[0].mxu0
      %1492 = vmatprep.mubr.f32.mxu0 %v1184
      %1493 = vmatmul.mubr.f32.gmra.mrb[0].mxu0 %v1176
      %v1494 = vpop.f32.mrb[0].mxu0
      %v1495 = vadd.f32 %v1390, %v1494
      %v1496 = vpop.f32.mrb[0].mxu0
      %1497 = vdwg.mxu0
      %1498 = vmatprep.subr.mxu0 0.0
      %1499 = vmatpush1.msra.mxu0 %v1249
      %1500 = vmatprep.subr.mxu0 0.0
      %1501 = vmatpush1.msra.mxu0 %v1250
      %1502 = vmatprep.subr.mxu0 0.0
      %1503 = vmatpush1.msra.mxu0 %v1251
      %1504 = vmatprep.subr.mxu0 0.0
      %1505 = vmatpush1.msra.mxu0 %v1252
      %1506 = vmatprep.subr.mxu0 0.0
      %1507 = vmatpush1.msra.mxu0 %v1253
      %1508 = vmatprep.subr.mxu0 0.0
      %1509 = vmatpush1.msra.mxu0 %v1254
      %1510 = vmatprep.subr.mxu0 0.0
      %1511 = vmatpush1.msra.mxu0 %v1255
      %1512 = vmatprep.subr.mxu0 0.0
      %1513 = vmatpush1.msra.mxu0 %v1256
      %1514 = vmatprep.subr.mxu0 0.0
      %1515 = vmatpush1.msra.mxu0 0.0
      %1516 = vmatprep.subr.mxu0 0.0
      %1517 = vmatpush1.msra.mxu0 0.0
      %1518 = vmatprep.subr.mxu0 0.0
      %1519 = vmatpush1.msra.mxu0 0.0
      %1520 = vmatprep.subr.mxu0 0.0
      %1521 = vmatpush1.msra.mxu0 0.0
      %1522 = vmatprep.subr.mxu0 0.0
      %1523 = vmatpush1.msra.mxu0 0.0
      %1524 = vmatprep.subr.mxu0 0.0
      %1525 = vmatpush1.msra.mxu0 0.0
      %1526 = vmatprep.subr.mxu0 0.0
      %1527 = vmatpush1.msra.mxu0 0.0
      %1528 = vmatprep.subr.mxu0 0.0
      %1529 = vmatpush1.msra.mxu0 0.0
      %1530 = vmatprep.subr.mxu0 0.0
      %1531 = vmatpush1.msra.mxu0 0.0
      %1532 = vmatprep.subr.mxu0 0.0
      %1533 = vmatpush1.msra.mxu0 0.0
      %1534 = vmatprep.subr.mxu0 0.0
      %1535 = vmatpush1.msra.mxu0 0.0
      %1536 = vmatprep.subr.mxu0 0.0
      %1537 = vmatpush1.msra.mxu0 0.0
      %1538 = vmatprep.subr.mxu0 0.0
      %1539 = vmatpush1.msra.mxu0 0.0
      %1540 = vmatprep.subr.mxu0 0.0
      %1541 = vmatpush1.msra.mxu0 0.0
      %1542 = vmatprep.subr.mxu0 0.0
      %1543 = vmatpush1.msra.mxu0 0.0
      %1544 = vmatprep.subr.mxu0 0.0
      %1545 = vmatpush1.msra.mxu0 0.0
      %1546 = vmatprep.subr.mxu0 0.0
      %1547 = vmatpush1.msra.mxu0 0.0
      %1548 = vmatprep.subr.mxu0 0.0
      %1549 = vmatpush1.msra.mxu0 0.0
      %1550 = vmatprep.subr.mxu0 0.0
      %1551 = vmatpush1.msra.mxu0 0.0
      %1552 = vmatprep.subr.mxu0 0.0
      %1553 = vmatpush1.msra.mxu0 0.0
      %1554 = vmatprep.subr.mxu0 0.0
      %1555 = vmatpush1.msra.mxu0 0.0
      %1556 = vmatprep.subr.mxu0 0.0
      %1557 = vmatpush1.msra.mxu0 0.0
      %1558 = vmatprep.subr.mxu0 0.0
      %1559 = vmatpush1.msra.mxu0 0.0
      %1560 = vmatprep.subr.mxu0 0.0
      %1561 = vmatpush1.msra.mxu0 0.0
      %1562 = vmatprep.mubr.f32.mxu0 0.0
      %1563 = vmatmul.mubr.f32.gmra.mrb[0].mxu0 %v1265
      %v1564 = vpop.f32.mrb[0].mxu0
      %v1565 = vadd.f32 %v1460, %v1564
      %v1566 = vpop.f32.mrb[0].mxu0
      %1567 = vmatprep.mubr.f32.mxu0 0.0
      %1568 = vmatmul.mubr.f32.gmra.mrb[0].mxu0 %v1268
      %v1569 = vpop.f32.mrb[0].mxu0
      %v1570 = vadd.f32 %v1465, %v1569
      %v1571 = vpop.f32.mrb[0].mxu0
      %1572 = vmatprep.mubr.f32.mxu0 0.0
      %1573 = vmatmul.mubr.f32.gmra.mrb[0].mxu0 %v1271
      %v1574 = vpop.f32.mrb[0].mxu0
      %v1575 = vadd.f32 %v1470, %v1574
      %v1576 = vpop.f32.mrb[0].mxu0
      %1577 = vmatprep.mubr.f32.mxu0 0.0
      %1578 = vmatmul.mubr.f32.gmra.mrb[0].mxu0 %v1274
      %v1579 = vpop.f32.mrb[0].mxu0
      %v1580 = vadd.f32 %v1475, %v1579
      %v1581 = vpop.f32.mrb[0].mxu0
      %1582 = vmatprep.mubr.f32.mxu0 0.0
      %1583 = vmatmul.mubr.f32.gmra.mrb[0].mxu0 %v1277
      %v1584 = vpop.f32.mrb[0].mxu0
      %v1585 = vadd.f32 %v1480, %v1584
      %v1586 = vpop.f32.mrb[0].mxu0
      %1587 = vmatprep.mubr.f32.mxu0 0.0
      %1588 = vmatmul.mubr.f32.gmra.mrb[0].mxu0 %v1280
      %v1589 = vpop.f32.mrb[0].mxu0
      %v1590 = vadd.f32 %v1485, %v1589
      %v1591 = vpop.f32.mrb[0].mxu0
      %1592 = vmatprep.mubr.f32.mxu0 0.0
      %1593 = vmatmul.mubr.f32.gmra.mrb[0].mxu0 %v1283
      %v1594 = vpop.f32.mrb[0].mxu0
      %v1595 = vadd.f32 %v1490, %v1594
      %v1596 = vpop.f32.mrb[0].mxu0
      %1597 = vmatprep.mubr.f32.mxu0 0.0
      %1598 = vmatmul.mubr.f32.gmra.mrb[0].mxu0 %v1286
      %v1599 = vpop.f32.mrb[0].mxu0
      %v1600 = vadd.f32 %v1495, %v1599
      %v1601 = vpop.f32.mrb[0].mxu0
      %1602 = vdwg.mxu0
      %v1603 = vmax.f32 %v1565, 0.0
      %v1604 = vmax.f32 %v1570, 0.0
      %v1605 = vmax.f32 %v1575, 0.0
      %v1606 = vmax.f32 %v1580, 0.0
      %v1607 = vmax.f32 %v1585, 0.0
      %v1608 = vmax.f32 %v1590, 0.0
      %v1609 = vmax.f32 %v1595, 0.0
      %v1610 = vmax.f32 %v1600, 0.0
      %v1611 = vadd.f32 %v267, %v1603
      %v1612 = vadd.f32 %v268, %v1604
      %v1613 = vadd.f32 %v269, %v1605
      %v1614 = vadd.f32 %v270, %v1606
      %v1615 = vadd.f32 %v271, %v1607
      %v1616 = vadd.f32 %v272, %v1608
      %v1617 = vadd.f32 %v273, %v1609
      %v1618 = vadd.f32 %v274, %v1610
      %1619 = vst.msk [vmem:[%s224] sm:$0xff] %vm225, %v1611
      %1620 = vst.msk [vmem:[%s224 + $0x8] sm:$0xff] %vm225, %v1612
      %1621 = vst.msk [vmem:[%s224 + $0x10] sm:$0xff] %vm225, %v1613
      %1622 = vst.msk [vmem:[%s224 + $0x18] sm:$0xff] %vm225, %v1614
      %1623 = vst.msk [vmem:[%s224 + $0x20] sm:$0xff] %vm225, %v1615
      %1624 = vst.msk [vmem:[%s224 + $0x28] sm:$0xff] %vm225, %v1616
      %1625 = vst.msk [vmem:[%s224 + $0x30] sm:$0xff] %vm225, %v1617
      %1626 = vst.msk [vmem:[%s224 + $0x38] sm:$0xff] %vm225, %v1618
      %p1627 = scmp.lt.s32.totalorder %s16, 1
      %s1628 = scalar_select %p1627, %s16, 1
      %s1629 = smul.addr %s1628, 8
      %s1630 = smul.addr %s1629, 8
      %s1631 = scalar_lea.vmem %s5, %s1630
      // Predicated region
      $region41: #{layer_forward.1} parent=39 // pred_check
        %p1632 = pneg %p144
      $region42: #{layer_forward.1} parent=39 // pred_check_branch
        %1634 = sbr.rel (%p1632) target = $region44
      $region43: #{layer_forward.1} parent=39 // pred_region
        _
      $region44: #{layer_forward.1} parent=39 // pred_fallthru
        _
    $region40: #{layer_forward.1} parent=5 // pred_fallthru
      _
    %p1635 = scmp.le.s32.totalorder 2, %s11
    // Predicated region
    $region45: #{layer_forward.1} parent=5 // pred_check
      %p1636 = pneg %p1635
    $region46: #{layer_forward.1} parent=5 // pred_check_branch
      %1638 = sbr.rel (%p1636) target = $region48
    $region47: #{layer_forward.1} parent=5 // pred_region
      %s1639 = ssub.s32 %s11, 2
      // Predicated region
      $region49: #{layer_forward.1} parent=47 // pred_check
        %p1640 = pneg %p150
      $region50: #{layer_forward.1} parent=47 // pred_check_branch
        %1642 = sbr.rel (%p1640) target = $region52
      $region51: #{layer_forward.1} parent=47 // pred_region
        %p1643 = scmp.lt.s32.totalorder %s17, 1
        %s1644 = scalar_select %p1643, %s17, 1
        %s1645 = smul.addr %s1644, 8
        %s1646 = smul.addr %s1645, 8
        %s1647 = scalar_lea.vmem %s5, %s1646
      $region52: #{layer_forward.1} parent=47 // pred_fallthru
        _
    $region48: #{layer_forward.1} parent=5 // pred_fallthru
      _
  $region6: #{layer_forward.1} parent=0 // loop_footer
    %s15 = sadd.s32 1, %s11
  $region7: #{layer_forward.1} parent=0 // loop_footer_branch
    %10 = sbr.rel target = $region3
  $region8: #{layer_forward.1} parent=0 // loop_exit
    _

</llo_original>
